<compile_context>
chip_gen: v7x
topology: tpu7x:2x2x1
jax: 0.10.0
libtpu: 0.0.40
codegen_flags: <defaults>
</compile_context>

<pallas_src>
import math
from functools import partial

import jax
import jax.numpy as jnp
from jax import lax
from jax.experimental import pallas as pl
from jax.experimental.pallas import tpu as pltpu


def _mha_kernel(xq_ref, xk_ref, xv_ref, mask_ref, wqkv_ref, wo_ref,
                gamma_ref, beta_ref, out_ref, *maybe_attn,
                bt, n_heads, d_k, d_v, d_model, lq, lk, ln_eps,
                mxu_dtype, return_attn):
    attn_ref = maybe_attn[0] if return_attn else None

    x_q = xq_ref[...]                        # (bt*lq, d_model) f32
    x_k = xk_ref[...]                        # (bt*lk, d_model) f32
    x_v = xv_ref[...]                        # (bt*lk, d_model) f32

    # Fused QKV weights: one array, one DMA / double-buffer; static lane slices.
    w_qkv = wqkv_ref[...]                    # (d_model, nh*(2*d_k+d_v)), mxu dtype
    nq = n_heads * d_k
    w_q = w_qkv[:, :nq]
    w_k = w_qkv[:, nq:2 * nq]
    w_v = w_qkv[:, 2 * nq:]

    scale = jnp.float32(1.0 / math.sqrt(d_k))
    # Lane-dense projections over the whole row block; scale folded into Q once.
    q_all = jnp.dot(x_q.astype(mxu_dtype), w_q,
                    preferred_element_type=jnp.float32) * scale    # (bt*lq, nh*dk)
    k_all = jnp.dot(x_k.astype(mxu_dtype), w_k,
                    preferred_element_type=jnp.float32)            # (bt*lk, nh*dk)
    v_all = jnp.dot(x_v.astype(mxu_dtype), w_v,
                    preferred_element_type=jnp.float32)            # (bt*lk, nh*dv)

    # Relayout to a joint (batch, head) leading batch axis (layout only; all
    # compute below is batched -- no per-(b, h) matmuls / softmaxes).
    def to_heads(mat, seq, hd):
        # (bt*seq, nh*hd) -> (bt*nh, seq, hd), b-major then h.
        parts = []
        for b in range(bt):
            rows = mat[b * seq:(b + 1) * seq, :]
            for h in range(n_heads):
                parts.append(rows[:, h * hd:(h + 1) * hd])
        return jnp.stack(parts, axis=0)

    q_h = to_heads(q_all, lq, d_k)           # (bt*nh, lq, d_k)
    k_h = to_heads(k_all, lk, d_k)           # (bt*nh, lk, d_k)
    v_h = to_heads(v_all, lk, d_v)           # (bt*nh, lk, d_v)

    # Additive mask bias; torch masked_fill semantics (any nonzero masks).
    bias = jnp.where(mask_ref[...] != 0, jnp.float32(-1e9), jnp.float32(0.0))
    bias = jnp.broadcast_to(bias[:, None, :, :], (bt, n_heads, lq, lk))
    bias = bias.reshape(bt * n_heads, lq, lk)

    # One batched contraction + ONE softmax over all (batch, head) pairs.
    scores = jnp.einsum("bqd,bkd->bqk",
                        q_h.astype(mxu_dtype), k_h.astype(mxu_dtype),
                        preferred_element_type=jnp.float32) + bias  # (bt*nh,lq,lk)

    m = jnp.max(scores, axis=-1, keepdims=True)
    e = jnp.exp(scores - m)
    s = jnp.sum(e, axis=-1, keepdims=True)
    r = pl.reciprocal(s, approx=True)              # EUP, off the VALU
    r = r * (jnp.float32(2.0) - s * r)             # one Newton step -> ~f32 accuracy
    p = e * r                                      # (bt*nh, lq, lk)

    if return_attn:
        # Single full-block write (no per-head masked stores). For Lk >= 128
        # this is lane-dense; at tiny Lk the padded store is negligible.
        attn_ref[...] = p.reshape(bt, n_heads, lq, lk).astype(attn_ref.dtype)

    ctx = jnp.einsum("bqk,bkd->bqd",
                     p.astype(mxu_dtype), v_h.astype(mxu_dtype),
                     preferred_element_type=jnp.float32)            # (bt*nh,lq,dv)

    # (bt*nh, lq, dv) -> (bt*lq, nh*dv) in-vreg: no VMEM scratch, no per-head
    # masked read-modify-write column stores.
    row_blocks = []
    for b in range(bt):
        row_blocks.append(jnp.concatenate(
            [ctx[b * n_heads + h] for h in range(n_heads)], axis=1))
    ctx_flat = row_blocks[0] if bt == 1 else jnp.concatenate(row_blocks, axis=0)

    # Output projection + residual + LayerNorm on the whole row block.
    y = jnp.dot(ctx_flat.astype(mxu_dtype), wo_ref[...],
                preferred_element_type=jnp.float32) + x_q
    mean = jnp.mean(y, axis=-1, keepdims=True)
    var = jnp.mean((y - mean) ** 2, axis=-1, keepdims=True)
    y_hat = (y - mean) * lax.rsqrt(var + jnp.float32(ln_eps))
    out_ref[...] = (y_hat * gamma_ref[...] + beta_ref[...]).astype(out_ref.dtype)


def _vmem_bytes_estimate(bt, lq, lk, n_heads, d_k, d_v, d_model):
    """Rough lane-padded per-grid-step VMEM footprint (f32-equivalent bytes)."""
    def lanes(n):
        return max(128, ((n + 127) // 128) * 128)
    rows_q, rows_k = bt * lq, bt * lk
    io = (rows_q + 2 * rows_k) * lanes(d_model)          # x_q / x_k / x_v blocks
    io += bt * lq * lanes(lk)                            # mask block
    io += rows_q * lanes(d_model)                        # out block
    io += bt * n_heads * lq * lanes(lk)                  # attn block
    w = d_model * lanes(n_heads * (2 * d_k + d_v))       # fused QKV weight
    w += n_heads * d_v * lanes(d_model) + 2 * lanes(d_model)
    live = bt * n_heads * (3 * lq * lanes(lk)                       # scores/e/p
                           + (lq + 2 * lk) * lanes(max(d_k, d_v))   # q_h/k_h/v_h
                           + lq * lanes(d_v))                       # ctx
    live += (rows_q + 2 * rows_k) * lanes(n_heads * max(d_k, d_v))  # q/k/v_all
    return 4 * (2 * (io + w) + live)     # x2: double-buffered pipeline blocks


def _pick_batch_block(batch, lq, lk, n_heads, d_k, d_v, d_model,
                      vmem_budget_bytes=40 * 1024 * 1024,
                      target_rows=1024, max_unroll=32):
    """Largest batch block that (a) keeps >= 2 grid steps when batch >= 2 so
    both v7x TensorCores get work, (b) fits a conservative VMEM budget (safe
    for v7x's 64 MiB physical VMEM), (c) bounds the in-kernel static unroll."""
    best = 1
    for bt in range(1, batch + 1):
        if batch % bt:
            continue
        if batch >= 2 and batch // bt < 2:
            continue
        if bt * max(lq, lk) > target_rows:
            continue
        if bt * n_heads > max_unroll:
            continue
        if _vmem_bytes_estimate(bt, lq, lk, n_heads, d_k, d_v,
                                d_model) > vmem_budget_bytes:
            continue
        best = bt
    return best


def multi_head_attention(input_q, input_k, input_v, attn_mask,
                         w_q, w_k, w_v, w_o, gamma, beta, *,
                         n_heads, d_k, d_v, d_model, ln_eps=1e-5,
                         mxu_dtype=jnp.bfloat16, return_attn=True,
                         batch_block=None):
    B, Lq, _ = input_q.shape
    Lk = input_k.shape[1]

    bt = batch_block if batch_block is not None else _pick_batch_block(
        B, Lq, Lk, n_heads, d_k, d_v, d_model)
    assert B % bt == 0, "batch_block must divide batch"
    nb = B // bt

    # Row-wise operands as (grid, rows, d_model) slabs (free reshapes).
    xq3 = input_q.astype(jnp.float32).reshape(nb, bt * Lq, d_model)
    xk3 = input_k.astype(jnp.float32).reshape(nb, bt * Lk, d_model)
    xv3 = input_v.astype(jnp.float32).reshape(nb, bt * Lk, d_model)
    # TODO(synk): pass the mask as int8 for long sequences to cut HBM traffic 4x.
    mask_f = attn_mask.astype(jnp.float32)
    w_qkv = jnp.concatenate([w_q, w_k, w_v], axis=1).astype(mxu_dtype)
    w_o_m = w_o.astype(mxu_dtype)
    gamma2 = gamma.reshape(1, d_model).astype(jnp.float32)
    beta2 = beta.reshape(1, d_model).astype(jnp.float32)

    kernel = partial(_mha_kernel, bt=bt, n_heads=n_heads, d_k=d_k, d_v=d_v,
                     d_model=d_model, lq=Lq, lk=Lk, ln_eps=ln_eps,
                     mxu_dtype=mxu_dtype, return_attn=return_attn)

    in_specs = [
        pl.BlockSpec((None, bt * Lq, d_model), lambda i: (i, 0, 0)),   # x_q rows
        pl.BlockSpec((None, bt * Lk, d_model), lambda i: (i, 0, 0)),   # x_k rows
        pl.BlockSpec((None, bt * Lk, d_model), lambda i: (i, 0, 0)),   # x_v rows
        pl.BlockSpec((bt, Lq, Lk), lambda i: (i, 0, 0)),               # mask
        pl.BlockSpec((d_model, n_heads * (2 * d_k + d_v)), lambda i: (0, 0)),
        pl.BlockSpec((n_heads * d_v, d_model), lambda i: (0, 0)),      # fc weight
        pl.BlockSpec((1, d_model), lambda i: (0, 0)),                  # ln gamma
        pl.BlockSpec((1, d_model), lambda i: (0, 0)),                  # ln beta
    ]
    out_spec_y = pl.BlockSpec((None, bt * Lq, d_model), lambda i: (i, 0, 0))

    if return_attn:
        out_shape = (jax.ShapeDtypeStruct((nb, bt * Lq, d_model), jnp.float32),
                     jax.ShapeDtypeStruct((B, n_heads, Lq, Lk), jnp.float32))
        out_specs = [out_spec_y,
                     pl.BlockSpec((bt, n_heads, Lq, Lk), lambda i: (i, 0, 0, 0))]
    else:
        out_shape = jax.ShapeDtypeStruct((nb, bt * Lq, d_model), jnp.float32)
        out_specs = out_spec_y

    est = _vmem_bytes_estimate(bt, Lq, Lk, n_heads, d_k, d_v, d_model)
    vmem_limit = int(min(96 * 2**20, max(32 * 2**20, 2 * est)))

    grid_spec = pltpu.PrefetchScalarGridSpec(
        num_scalar_prefetch=0, grid=(nb,),
        in_specs=in_specs, out_specs=out_specs)

    call = pl.pallas_call(
        kernel, out_shape=out_shape, grid_spec=grid_spec,
        compiler_params=pltpu.CompilerParams(
            dimension_semantics=("parallel",),
            vmem_limit_bytes=vmem_limit))

    if return_attn:
        out3, attn = call(xq3, xk3, xv3, mask_f, w_qkv, w_o_m, gamma2, beta2)
        return out3.reshape(B, Lq, d_model), attn
    out3 = call(xq3, xk3, xv3, mask_f, w_qkv, w_o_m, gamma2, beta2)
    return out3.reshape(B, Lq, d_model)


def _reference(input_q, input_k, input_v, attn_mask,
               w_q, w_k, w_v, w_o, gamma, beta,
               *, n_heads, d_k, d_v, d_model, ln_eps=1e-5):
    B, Lq, _ = input_q.shape
    Lk = input_k.shape[1]
    Q = (input_q @ w_q).reshape(B, Lq, n_heads, d_k).transpose(0, 2, 1, 3)
    K = (input_k @ w_k).reshape(B, Lk, n_heads, d_k).transpose(0, 2, 1, 3)
    V = (input_v @ w_v).reshape(B, Lk, n_heads, d_v).transpose(0, 2, 1, 3)
    scores = jnp.einsum("bhqd,bhkd->bhqk", Q, K) / math.sqrt(d_k)
    mask = attn_mask[:, None, :, :].astype(bool)
    scores = jnp.where(mask, -1e9, scores)
    attn = jax.nn.softmax(scores, axis=-1)
    ctx = jnp.einsum("bhqk,bhkd->bhqd", attn, V)
    ctx = ctx.transpose(0, 2, 1, 3).reshape(B, Lq, n_heads * d_v)
    out = ctx @ w_o + input_q
    mu = out.mean(-1, keepdims=True)
    var = ((out - mu) ** 2).mean(-1, keepdims=True)
    out = (out - mu) / jnp.sqrt(var + ln_eps) * gamma + beta
    return out, attn


if __name__ == "__main__":
    key = jax.random.PRNGKey(0)

    def make_inputs(B, Lq, Lk, n_heads, d_k, d_v, d_model, key):
        ks = jax.random.split(key, 7)
        input_q = jax.random.normal(ks[0], (B, Lq, d_model), jnp.float32)
        input_k = jax.random.normal(ks[1], (B, Lk, d_model), jnp.float32)
        input_v = jax.random.normal(ks[2], (B, Lk, d_model), jnp.float32)
        sc = 1.0 / math.sqrt(d_model)
        w_q = jax.random.uniform(ks[3], (d_model, n_heads * d_k), jnp.float32, -sc, sc)
        w_k = jax.random.uniform(ks[4], (d_model, n_heads * d_k), jnp.float32, -sc, sc)
        w_v = jax.random.uniform(ks[5], (d_model, n_heads * d_v), jnp.float32, -sc, sc)
        so = 1.0 / math.sqrt(n_heads * d_v)
        w_o = jax.random.uniform(ks[6], (n_heads * d_v, d_model), jnp.float32, -so, so)
        gamma = jnp.ones((d_model,), jnp.float32)    # fresh nn.LayerNorm defaults
        beta = jnp.zeros((d_model,), jnp.float32)
        mask = jnp.zeros((B, Lq, Lk), jnp.float32).at[:, :, Lk - 2:].set(1.0)
        return (input_q, input_k, input_v, mask, w_q, w_k, w_v, w_o, gamma, beta)

    cfg = dict(n_heads=4, d_k=8, d_v=8, d_model=32)

    # Case 1: accuracy path (f32 MXU operands), B=2, Lq=Lk=8 -> bt=1, 2 grid steps.
    args1 = make_inputs(2, 8, 8, key=jax.random.fold_in(key, 1), **cfg)
    out1, attn1 = multi_head_attention(*args1, **cfg, mxu_dtype=jnp.float32)
    out1 = jax.block_until_ready(out1)
    attn1 = jax.block_until_ready(attn1)
    ref_out1, ref_attn1 = _reference(*args1, **cfg)
    assert out1.shape == (2, 8, 32) and attn1.shape == (2, 4, 8, 8)
    assert jnp.allclose(out1, ref_out1, atol=2e-4, rtol=2e-4)
    assert jnp.allclose(attn1, ref_attn1, atol=2e-4, rtol=2e-4)

    # Case 2: default bf16 MXU operands, B=4, Lq=8, Lk=16 -> bt=2, 2 grid steps.
    args2 = make_inputs(4, 8, 16, key=jax.random.fold_in(key, 2), **cfg)
    out2, attn2 = multi_head_attention(*args2, **cfg)
    out2 = jax.block_until_ready(out2)
    attn2 = jax.block_until_ready(attn2)
    ref_out2, ref_attn2 = _reference(*args2, **cfg)
    assert out2.shape == (4, 8, 32) and attn2.shape == (4, 4, 8, 16)
    assert jnp.allclose(out2, ref_out2, atol=5e-2, rtol=5e-2)
    assert jnp.allclose(attn2, ref_attn2, atol=2e-2, rtol=2e-2)

    # Case 3: drop the attention-probability output (largest HBM write removed).
    out3 = multi_head_attention(*args1, **cfg, return_attn=False)
    out3 = jax.block_until_ready(out3)
    assert out3.shape == (2, 8, 32)
    assert jnp.allclose(out3, ref_out1, atol=5e-2, rtol=5e-2)

    print("KERNEL_OK")
</pallas_src>

<mosaic_0001>
module attributes {stable_mosaic.version = 11 : i64} {
  func.func @_mha_kernel(%arg0: i32, %arg1: memref<1x8x32xf32, #tpu.memory_space<vmem>>, %arg2: memref<1x8x32xf32, #tpu.memory_space<vmem>>, %arg3: memref<1x8x32xf32, #tpu.memory_space<vmem>>, %arg4: memref<1x8x8xf32, #tpu.memory_space<vmem>>, %arg5: memref<32x96xf32, #tpu.memory_space<vmem>>, %arg6: memref<32x32xf32, #tpu.memory_space<vmem>>, %arg7: memref<1x32xf32, #tpu.memory_space<vmem>>, %arg8: memref<1x32xf32, #tpu.memory_space<vmem>>, %arg9: memref<1x8x32xf32, #tpu.memory_space<vmem>>, %arg10: memref<1x4x8x8xf32, #tpu.memory_space<vmem>>) attributes {dimension_semantics = [#tpu.dimension_semantics<parallel>], iteration_bounds = array<i64: 2>, scalar_prefetch = 0 : i64, scratch_operands = 0 : i64, tpu.core_type = #tpu.core_type<tc>, window_params = [{transform_indices = @transform_0, window_bounds = array<i64: 1, 8, 32>}, {transform_indices = @transform_1, window_bounds = array<i64: 1, 8, 32>}, {transform_indices = @transform_2, window_bounds = array<i64: 1, 8, 32>}, {transform_indices = @transform_3, window_bounds = array<i64: 1, 8, 8>}, {pipeline_mode = #tpu.pipeline_mode<synchronous>, transform_indices = @transform_4, window_bounds = array<i64: 32, 96>}, {pipeline_mode = #tpu.pipeline_mode<synchronous>, transform_indices = @transform_5, window_bounds = array<i64: 32, 32>}, {pipeline_mode = #tpu.pipeline_mode<synchronous>, transform_indices = @transform_6, window_bounds = array<i64: 1, 32>}, {pipeline_mode = #tpu.pipeline_mode<synchronous>, transform_indices = @transform_7, window_bounds = array<i64: 1, 32>}, {transform_indices = @transform_8, window_bounds = array<i64: 1, 8, 32>}, {transform_indices = @transform_9, window_bounds = array<i64: 1, 4, 8, 8>}]} {
    %c0 = arith.constant 0 : index
    %c0_0 = arith.constant 0 : index
    %c0_1 = arith.constant 0 : index
    %0 = vector.load %arg1[%c0, %c0_0, %c0_1] : memref<1x8x32xf32, #tpu.memory_space<vmem>>, vector<1x8x32xf32>
    %1 = vector.shape_cast %0 : vector<1x8x32xf32> to vector<8x32xf32>
    %c0_2 = arith.constant 0 : index
    %c0_3 = arith.constant 0 : index
    %c0_4 = arith.constant 0 : index
    %2 = vector.load %arg2[%c0_2, %c0_3, %c0_4] : memref<1x8x32xf32, #tpu.memory_space<vmem>>, vector<1x8x32xf32>
    %3 = vector.shape_cast %2 : vector<1x8x32xf32> to vector<8x32xf32>
    %c0_5 = arith.constant 0 : index
    %c0_6 = arith.constant 0 : index
    %c0_7 = arith.constant 0 : index
    %4 = vector.load %arg3[%c0_5, %c0_6, %c0_7] : memref<1x8x32xf32, #tpu.memory_space<vmem>>, vector<1x8x32xf32>
    %5 = vector.shape_cast %4 : vector<1x8x32xf32> to vector<8x32xf32>
    %c0_8 = arith.constant 0 : index
    %c0_9 = arith.constant 0 : index
    %6 = vector.load %arg5[%c0_8, %c0_9] : memref<32x96xf32, #tpu.memory_space<vmem>>, vector<32x96xf32>
    %7 = vector.extract_strided_slice %6 {offsets = [0, 0], sizes = [32, 32], strides = [1, 1]} : vector<32x96xf32> to vector<32x32xf32>
    %8 = vector.extract_strided_slice %6 {offsets = [0, 32], sizes = [32, 32], strides = [1, 1]} : vector<32x96xf32> to vector<32x32xf32>
    %9 = vector.extract_strided_slice %6 {offsets = [0, 64], sizes = [32, 32], strides = [1, 1]} : vector<32x96xf32> to vector<32x32xf32>
    %cst = arith.constant dense<0.000000e+00> : vector<8x32xf32>
    %10 = tpu.matmul %1, %7, %cst {dimension_numbers = #tpu.dot_dimension_numbers<[1], [0], [0], [1], [0, 0, 1, 1], [], []>} : vector<8x32xf32>, vector<32x32xf32>, vector<8x32xf32> -> vector<8x32xf32>
    %cst_10 = arith.constant 0.353553385 : f32
    %11 = vector.broadcast %cst_10 : f32 to vector<8x32xf32>
    %12 = arith.mulf %10, %11 : vector<8x32xf32>
    %cst_11 = arith.constant dense<0.000000e+00> : vector<8x32xf32>
    %13 = tpu.matmul %3, %8, %cst_11 {dimension_numbers = #tpu.dot_dimension_numbers<[1], [0], [0], [1], [0, 0, 1, 1], [], []>} : vector<8x32xf32>, vector<32x32xf32>, vector<8x32xf32> -> vector<8x32xf32>
    %cst_12 = arith.constant dense<0.000000e+00> : vector<8x32xf32>
    %14 = tpu.matmul %5, %9, %cst_12 {dimension_numbers = #tpu.dot_dimension_numbers<[1], [0], [0], [1], [0, 0, 1, 1], [], []>} : vector<8x32xf32>, vector<32x32xf32>, vector<8x32xf32> -> vector<8x32xf32>
    %15 = vector.extract_strided_slice %12 {offsets = [0, 0], sizes = [8, 8], strides = [1, 1]} : vector<8x32xf32> to vector<8x8xf32>
    %16 = vector.extract_strided_slice %12 {offsets = [0, 8], sizes = [8, 8], strides = [1, 1]} : vector<8x32xf32> to vector<8x8xf32>
    %17 = vector.extract_strided_slice %12 {offsets = [0, 16], sizes = [8, 8], strides = [1, 1]} : vector<8x32xf32> to vector<8x8xf32>
    %18 = vector.extract_strided_slice %12 {offsets = [0, 24], sizes = [8, 8], strides = [1, 1]} : vector<8x32xf32> to vector<8x8xf32>
    %19 = vector.shape_cast %15 : vector<8x8xf32> to vector<1x8x8xf32>
    %20 = vector.shape_cast %16 : vector<8x8xf32> to vector<1x8x8xf32>
    %21 = vector.shape_cast %17 : vector<8x8xf32> to vector<1x8x8xf32>
    %22 = vector.shape_cast %18 : vector<8x8xf32> to vector<1x8x8xf32>
    %23 = tpu.concatenate %19, %20, %21, %22 in 0 : vector<1x8x8xf32>, vector<1x8x8xf32>, vector<1x8x8xf32>, vector<1x8x8xf32> -> vector<4x8x8xf32>
    %24 = vector.extract_strided_slice %13 {offsets = [0, 0], sizes = [8, 8], strides = [1, 1]} : vector<8x32xf32> to vector<8x8xf32>
    %25 = vector.extract_strided_slice %13 {offsets = [0, 8], sizes = [8, 8], strides = [1, 1]} : vector<8x32xf32> to vector<8x8xf32>
    %26 = vector.extract_strided_slice %13 {offsets = [0, 16], sizes = [8, 8], strides = [1, 1]} : vector<8x32xf32> to vector<8x8xf32>
    %27 = vector.extract_strided_slice %13 {offsets = [0, 24], sizes = [8, 8], strides = [1, 1]} : vector<8x32xf32> to vector<8x8xf32>
    %28 = vector.shape_cast %24 : vector<8x8xf32> to vector<1x8x8xf32>
    %29 = vector.shape_cast %25 : vector<8x8xf32> to vector<1x8x8xf32>
    %30 = vector.shape_cast %26 : vector<8x8xf32> to vector<1x8x8xf32>
    %31 = vector.shape_cast %27 : vector<8x8xf32> to vector<1x8x8xf32>
    %32 = tpu.concatenate %28, %29, %30, %31 in 0 : vector<1x8x8xf32>, vector<1x8x8xf32>, vector<1x8x8xf32>, vector<1x8x8xf32> -> vector<4x8x8xf32>
    %33 = vector.extract_strided_slice %14 {offsets = [0, 0], sizes = [8, 8], strides = [1, 1]} : vector<8x32xf32> to vector<8x8xf32>
    %34 = vector.extract_strided_slice %14 {offsets = [0, 8], sizes = [8, 8], strides = [1, 1]} : vector<8x32xf32> to vector<8x8xf32>
    %35 = vector.extract_strided_slice %14 {offsets = [0, 16], sizes = [8, 8], strides = [1, 1]} : vector<8x32xf32> to vector<8x8xf32>
    %36 = vector.extract_strided_slice %14 {offsets = [0, 24], sizes = [8, 8], strides = [1, 1]} : vector<8x32xf32> to vector<8x8xf32>
    %37 = vector.shape_cast %33 : vector<8x8xf32> to vector<1x8x8xf32>
    %38 = vector.shape_cast %34 : vector<8x8xf32> to vector<1x8x8xf32>
    %39 = vector.shape_cast %35 : vector<8x8xf32> to vector<1x8x8xf32>
    %40 = vector.shape_cast %36 : vector<8x8xf32> to vector<1x8x8xf32>
    %41 = tpu.concatenate %37, %38, %39, %40 in 0 : vector<1x8x8xf32>, vector<1x8x8xf32>, vector<1x8x8xf32>, vector<1x8x8xf32> -> vector<4x8x8xf32>
    %c0_13 = arith.constant 0 : index
    %c0_14 = arith.constant 0 : index
    %c0_15 = arith.constant 0 : index
    %42 = vector.load %arg4[%c0_13, %c0_14, %c0_15] : memref<1x8x8xf32, #tpu.memory_space<vmem>>, vector<1x8x8xf32>
    %cst_16 = arith.constant 0.000000e+00 : f32
    %43 = vector.broadcast %cst_16 : f32 to vector<1x8x8xf32>
    %44 = arith.cmpf one, %42, %43 : vector<1x8x8xf32>
    %cst_17 = arith.constant -1.000000e+09 : f32
    %cst_18 = arith.constant 0.000000e+00 : f32
    %45 = vector.broadcast %cst_17 : f32 to vector<1x8x8xf32>
    %46 = vector.broadcast %cst_18 : f32 to vector<1x8x8xf32>
    %47 = arith.select %44, %45, %46 : vector<1x8x8xi1>, vector<1x8x8xf32>
    %48 = vector.shape_cast %47 : vector<1x8x8xf32> to vector<1x1x8x8xf32>
    %49 = vector.shape_cast %48 : vector<1x1x8x8xf32> to vector<1x1x8x8xf32>
    %50 = vector.broadcast %49 : vector<1x1x8x8xf32> to vector<1x4x8x8xf32>
    %51 = vector.shape_cast %50 : vector<1x4x8x8xf32> to vector<4x8x8xf32>
    "tpu.trace_start"() <{level = 10 : i32, message = "bqd,bkd->bqk"}> : () -> ()
    %cst_19 = arith.constant dense<0.000000e+00> : vector<4x8x8xf32>
    %52 = tpu.matmul %23, %32, %cst_19 {dimension_numbers = #tpu.dot_dimension_numbers<[2], [2], [1], [1], [0, 0, 0, 1, 1, 1], [0], [0]>} : vector<4x8x8xf32>, vector<4x8x8xf32>, vector<4x8x8xf32> -> vector<4x8x8xf32>
    "tpu.trace_stop"() : () -> ()
    %53 = arith.addf %52, %51 : vector<4x8x8xf32>
    %cst_20 = arith.constant dense<0xFF800000> : vector<4x8xf32>
    %54 = vector.multi_reduction <maximumf>, %53, %cst_20 [2] : vector<4x8x8xf32> to vector<4x8xf32>
    %55 = vector.shape_cast %54 : vector<4x8xf32> to vector<4x8x1xf32>
    %56 = vector.broadcast %55 : vector<4x8x1xf32> to vector<4x8x8xf32>
    %57 = arith.subf %53, %56 : vector<4x8x8xf32>
    %58 = math.exp %57 : vector<4x8x8xf32>
    %cst_21 = arith.constant dense<0.000000e+00> : vector<4x8xf32>
    %59 = vector.multi_reduction <add>, %58, %cst_21 [2] : vector<4x8x8xf32> to vector<4x8xf32>
    %60 = vector.shape_cast %59 : vector<4x8xf32> to vector<4x8x1xf32>
    %61 = tpu.reciprocal %60 {approx = true} : vector<4x8x1xf32> -> vector<4x8x1xf32>
    %62 = arith.mulf %60, %61 : vector<4x8x1xf32>
    %cst_22 = arith.constant 2.000000e+00 : f32
    %63 = vector.broadcast %cst_22 : f32 to vector<4x8x1xf32>
    %64 = arith.subf %63, %62 : vector<4x8x1xf32>
    %65 = arith.mulf %61, %64 : vector<4x8x1xf32>
    %66 = vector.broadcast %65 : vector<4x8x1xf32> to vector<4x8x8xf32>
    %67 = arith.mulf %58, %66 : vector<4x8x8xf32>
    %68 = vector.shape_cast %67 : vector<4x8x8xf32> to vector<1x4x8x8xf32>
    %c0_23 = arith.constant 0 : index
    %c0_24 = arith.constant 0 : index
    %c0_25 = arith.constant 0 : index
    %c0_26 = arith.constant 0 : index
    %69 = vector.load %arg10[%c0_23, %c0_24, %c0_25, %c0_26] : memref<1x4x8x8xf32, #tpu.memory_space<vmem>>, vector<1x4x8x8xf32>
    tpu.vector_store %arg10[%c0_23, %c0_24, %c0_25, %c0_26], %68 {strides = array<i32>} : memref<1x4x8x8xf32, #tpu.memory_space<vmem>>, vector<1x4x8x8xf32>,
    "tpu.trace_start"() <{level = 10 : i32, message = "bqk,bkd->bqd"}> : () -> ()
    %cst_27 = arith.constant dense<0.000000e+00> : vector<4x8x8xf32>
    %70 = tpu.matmul %67, %41, %cst_27 {dimension_numbers = #tpu.dot_dimension_numbers<[2], [1], [1], [2], [0, 0, 0, 1, 1, 2], [0], [0]>} : vector<4x8x8xf32>, vector<4x8x8xf32>, vector<4x8x8xf32> -> vector<4x8x8xf32>
    "tpu.trace_stop"() : () -> ()
    %71 = vector.extract_strided_slice %70 {offsets = [0, 0, 0], sizes = [1, 8, 8], strides = [1, 1, 1]} : vector<4x8x8xf32> to vector<1x8x8xf32>
    %72 = vector.shape_cast %71 : vector<1x8x8xf32> to vector<8x8xf32>
    %73 = vector.extract_strided_slice %70 {offsets = [1, 0, 0], sizes = [1, 8, 8], strides = [1, 1, 1]} : vector<4x8x8xf32> to vector<1x8x8xf32>
    %74 = vector.shape_cast %73 : vector<1x8x8xf32> to vector<8x8xf32>
    %75 = vector.extract_strided_slice %70 {offsets = [2, 0, 0], sizes = [1, 8, 8], strides = [1, 1, 1]} : vector<4x8x8xf32> to vector<1x8x8xf32>
    %76 = vector.shape_cast %75 : vector<1x8x8xf32> to vector<8x8xf32>
    %77 = vector.extract_strided_slice %70 {offsets = [3, 0, 0], sizes = [1, 8, 8], strides = [1, 1, 1]} : vector<4x8x8xf32> to vector<1x8x8xf32>
    %78 = vector.shape_cast %77 : vector<1x8x8xf32> to vector<8x8xf32>
    %79 = tpu.concatenate %72, %74, %76, %78 in 1 : vector<8x8xf32>, vector<8x8xf32>, vector<8x8xf32>, vector<8x8xf32> -> vector<8x32xf32>
    %c0_28 = arith.constant 0 : index
    %c0_29 = arith.constant 0 : index
    %80 = vector.load %arg6[%c0_28, %c0_29] : memref<32x32xf32, #tpu.memory_space<vmem>>, vector<32x32xf32>
    %cst_30 = arith.constant dense<0.000000e+00> : vector<8x32xf32>
    %81 = tpu.matmul %79, %80, %cst_30 {dimension_numbers = #tpu.dot_dimension_numbers<[1], [0], [0], [1], [0, 0, 1, 1], [], []>} : vector<8x32xf32>, vector<32x32xf32>, vector<8x32xf32> -> vector<8x32xf32>
    %82 = arith.addf %81, %1 : vector<8x32xf32>
    %cst_31 = arith.constant dense<0.000000e+00> : vector<8xf32>
    %83 = vector.multi_reduction <add>, %82, %cst_31 [1] : vector<8x32xf32> to vector<8xf32>
    %84 = vector.shape_cast %83 : vector<8xf32> to vector<8x1xf32>
    %cst_32 = arith.constant 3.200000e+01 : f32
    %85 = vector.broadcast %cst_32 : f32 to vector<8x1xf32>
    %86 = arith.divf %84, %85 : vector<8x1xf32>
    %87 = vector.broadcast %86 : vector<8x1xf32> to vector<8x32xf32>
    %88 = arith.subf %82, %87 : vector<8x32xf32>
    %89 = arith.mulf %88, %88 : vector<8x32xf32>
    %cst_33 = arith.constant dense<0.000000e+00> : vector<8xf32>
    %90 = vector.multi_reduction <add>, %89, %cst_33 [1] : vector<8x32xf32> to vector<8xf32>
    %91 = vector.shape_cast %90 : vector<8xf32> to vector<8x1xf32>
    %cst_34 = arith.constant 3.200000e+01 : f32
    %92 = vector.broadcast %cst_34 : f32 to vector<8x1xf32>
    %93 = arith.divf %91, %92 : vector<8x1xf32>
    %94 = vector.broadcast %86 : vector<8x1xf32> to vector<8x32xf32>
    %95 = arith.subf %82, %94 : vector<8x32xf32>
    %cst_35 = arith.constant 9.99999974E-6 : f32
    %96 = vector.broadcast %cst_35 : f32 to vector<8x1xf32>
    %97 = arith.addf %93, %96 : vector<8x1xf32>
    %98 = math.rsqrt %97 : vector<8x1xf32>
    %99 = vector.broadcast %98 : vector<8x1xf32> to vector<8x32xf32>
    %100 = arith.mulf %95, %99 : vector<8x32xf32>
    %c0_36 = arith.constant 0 : index
    %c0_37 = arith.constant 0 : index
    %101 = vector.load %arg7[%c0_36, %c0_37] : memref<1x32xf32, #tpu.memory_space<vmem>>, vector<1x32xf32>
    %102 = vector.broadcast %101 : vector<1x32xf32> to vector<8x32xf32>
    %103 = arith.mulf %100, %102 : vector<8x32xf32>
    %c0_38 = arith.constant 0 : index
    %c0_39 = arith.constant 0 : index
    %104 = vector.load %arg8[%c0_38, %c0_39] : memref<1x32xf32, #tpu.memory_space<vmem>>, vector<1x32xf32>
    %105 = vector.broadcast %104 : vector<1x32xf32> to vector<8x32xf32>
    %106 = arith.addf %103, %105 : vector<8x32xf32>
    %c0_40 = arith.constant 0 : index
    %c0_41 = arith.constant 0 : index
    %c0_42 = arith.constant 0 : index
    %107 = vector.load %arg9[%c0_40, %c0_41, %c0_42] : memref<1x8x32xf32, #tpu.memory_space<vmem>>, vector<1x8x32xf32>
    %108 = vector.shape_cast %107 : vector<1x8x32xf32> to vector<8x32xf32>
    %109 = vector.shape_cast %106 : vector<8x32xf32> to vector<1x8x32xf32>
    tpu.vector_store %arg9[%c0_40, %c0_41, %c0_42], %109 {strides = array<i32>} : memref<1x8x32xf32, #tpu.memory_space<vmem>>, vector<1x8x32xf32>,
    return
  }
  func.func @transform_0(%arg0: i32) -> (i32, i32, i32) {
    %c0_i32 = arith.constant 0 : i32
    %c0_i32_0 = arith.constant 0 : i32
    %c0_i32_1 = arith.constant 0 : i32
    return %arg0, %c0_i32, %c0_i32_0 : i32, i32, i32
  }
  func.func @transform_1(%arg0: i32) -> (i32, i32, i32) {
    %c0_i32 = arith.constant 0 : i32
    %c0_i32_0 = arith.constant 0 : i32
    %c0_i32_1 = arith.constant 0 : i32
    return %arg0, %c0_i32, %c0_i32_0 : i32, i32, i32
  }
  func.func @transform_2(%arg0: i32) -> (i32, i32, i32) {
    %c0_i32 = arith.constant 0 : i32
    %c0_i32_0 = arith.constant 0 : i32
    %c0_i32_1 = arith.constant 0 : i32
    return %arg0, %c0_i32, %c0_i32_0 : i32, i32, i32
  }
  func.func @transform_3(%arg0: i32) -> (i32, i32, i32) {
    %c0_i32 = arith.constant 0 : i32
    %c0_i32_0 = arith.constant 0 : i32
    %c0_i32_1 = arith.constant 0 : i32
    return %arg0, %c0_i32, %c0_i32_0 : i32, i32, i32
  }
  func.func @transform_4(%arg0: i32) -> (i32, i32) {
    %c0_i32 = arith.constant 0 : i32
    %c0_i32_0 = arith.constant 0 : i32
    %c0_i32_1 = arith.constant 0 : i32
    return %c0_i32, %c0_i32_0 : i32, i32
  }
  func.func @transform_5(%arg0: i32) -> (i32, i32) {
    %c0_i32 = arith.constant 0 : i32
    %c0_i32_0 = arith.constant 0 : i32
    %c0_i32_1 = arith.constant 0 : i32
    return %c0_i32, %c0_i32_0 : i32, i32
  }
  func.func @transform_6(%arg0: i32) -> (i32, i32) {
    %c0_i32 = arith.constant 0 : i32
    %c0_i32_0 = arith.constant 0 : i32
    %c0_i32_1 = arith.constant 0 : i32
    return %c0_i32, %c0_i32_0 : i32, i32
  }
  func.func @transform_7(%arg0: i32) -> (i32, i32) {
    %c0_i32 = arith.constant 0 : i32
    %c0_i32_0 = arith.constant 0 : i32
    %c0_i32_1 = arith.constant 0 : i32
    return %c0_i32, %c0_i32_0 : i32, i32
  }
  func.func @transform_8(%arg0: i32) -> (i32, i32, i32) {
    %c0_i32 = arith.constant 0 : i32
    %c0_i32_0 = arith.constant 0 : i32
    %c0_i32_1 = arith.constant 0 : i32
    return %arg0, %c0_i32, %c0_i32_0 : i32, i32, i32
  }
  func.func @transform_9(%arg0: i32) -> (i32, i32, i32, i32) {
    %c0_i32 = arith.constant 0 : i32
    %c0_i32_0 = arith.constant 0 : i32
    %c0_i32_1 = arith.constant 0 : i32
    %c0_i32_2 = arith.constant 0 : i32
    return %arg0, %c0_i32, %c0_i32_0, %c0_i32_1 : i32, i32, i32, i32
  }
}

</mosaic_0001>

<llo_original>
// kernel: tpu_custom_call.1
$region0: #{tpu_custom_call.1}
  #allocation0 [shape = 'u32[]', space=smem, size = 0x4, offset = 0x4, fixed_abs, tag = 'smem constant byte address 0x4 - core index']
  #allocation1 [shape = 'u32[144,128]{1,0:T(1,128)}', space=vmem, size = 0x12000, scoped, tag = 'internal scratch']
  %s0 = inlined_call_operand.hbm [shape: f32[2,8,32], index: 0, kind: input, shape index: {}]
  %s1 = inlined_call_operand.hbm [shape: f32[2,8,32], index: 1, kind: input, shape index: {}]
  %s2 = inlined_call_operand.hbm [shape: f32[2,8,32], index: 2, kind: input, shape index: {}]
  %s3 = inlined_call_operand.hbm [shape: f32[2,8,8], index: 3, kind: input, shape index: {}]
  %s4 = inlined_call_operand.hbm [shape: f32[32,96], index: 4, kind: input, shape index: {}]
  %s5 = inlined_call_operand.hbm [shape: f32[32,32], index: 5, kind: input, shape index: {}]
  %s6 = inlined_call_operand.vmem [shape: f32[1,32], index: 6, kind: input, shape index: {}]
  %s7 = inlined_call_operand.vmem [shape: f32[1,32], index: 7, kind: input, shape index: {}]
  %s8 = inlined_call_operand.hbm [shape: f32[2,8,32], index: 8, kind: output, shape index: {0}]
  %s9 = inlined_call_operand.hbm [shape: f32[2,4,8,8], index: 9, kind: output, shape index: {1}]
  %10 = xla_tuple %s8, %s9
  %s11 = sld [smem:[#allocation0]]
  $region97: #{tpu_custom_call.1} parent=0
    _
  %s13 = ssub.s32 1, %s11
  %s14 = scalar_select 0, %s13, %s11
  $region1: #{tpu_custom_call.1} parent=0
    #allocation2 [shape = 'u8[8192]{0}', space=vmem, size = 0x2000, scoped, tag = 'input window, operand 0']
    #allocation3 [shape = 's32[2]{0}', space=sflag, size = 0x8, scoped, tag = 'scoped memory for tpu_custom_call.1']
    #allocation4 [shape = 's32[2]{0}', space=sflag, size = 0x8, scoped, tag = 'scoped memory for tpu_custom_call.1']
    #allocation5 [shape = 'u8[8192]{0}', space=vmem, size = 0x2000, scoped, tag = 'input window, operand 1']
    #allocation6 [shape = 's32[2]{0}', space=sflag, size = 0x8, scoped, tag = 'scoped memory for tpu_custom_call.1']
    #allocation7 [shape = 'u8[8192]{0}', space=vmem, size = 0x2000, scoped, tag = 'input window, operand 2']
    #allocation8 [shape = 'u8[8192]{0}', space=vmem, size = 0x2000, scoped, tag = 'input window, operand 3']
    #allocation9 [shape = 's32[2]{0}', space=sflag, size = 0x8, scoped, tag = 'scoped memory for tpu_custom_call.1']
    #allocation10 [shape = 'u8[16384]{0}', space=vmem, size = 0x4000, scoped, tag = 'input window, operand 4, single buffered']
    #allocation11 [shape = 'u8[16384]{0}', space=vmem, size = 0x4000, scoped, tag = 'input window, operand 5, single buffered']
    #allocation12 [shape = 's32[1]{0}', space=sflag, size = 0x4, scoped, tag = 'scoped memory for tpu_custom_call.1']
    #allocation13 [shape = 'u8[8192]{0}', space=vmem, size = 0x2000, scoped, tag = 'output window, operand 0']
    #allocation14 [shape = 'u8[32768]{0}', space=vmem, size = 0x8000, scoped, tag = 'output window, operand 1']
    #allocation15 [shape = 's32[2]{0}', space=sflag, size = 0x8, scoped, tag = 'scoped memory for tpu_custom_call.1']
    %15 = vsyncpa [#allocation3], 0
    %s16 = scalar_lea.sflag [#allocation3], 1
    %17 = vsyncpa %s16, 0
    %18 = vsyncpa [#allocation6], 0
    %s19 = scalar_lea.sflag [#allocation6], 1
    %20 = vsyncpa %s19, 0
    %21 = vsyncpa [#allocation9], 0
    %s22 = scalar_lea.sflag [#allocation9], 1
    %23 = vsyncpa %s22, 0
    %24 = vsyncpa [#allocation12], 0
    %25 = vsyncpa [#allocation4], 0
    %s26 = scalar_lea.sflag [#allocation4], 1
    %27 = vsyncpa %s26, 0
    %28 = vsyncpa [#allocation15], 0
    %s29 = scalar_lea.sflag [#allocation15], 1
    %30 = vsyncpa %s29, 0
    loop: start=0, step=1, limit=4
    $region2: #{tpu_custom_call.1} parent=1 // loop_pre_header
      _
    $region3: #{tpu_custom_call.1} parent=1 // loop_header
      %s32 = sphi 0, %s36
      %p33 = scmp.ge.s32.totalorder %s32, 4
      %s42 = sphi 0, %s44
      %s45 = sphi 0, %s42
      %s46 = sphi 0, %s45
      %s62 = sphi 0, %s46
      %s68 = sphi 0, %s70
      %s71 = sphi 0, %s68
      %s72 = sphi 0, %s71
      %s88 = sphi 0, %s72
      %s94 = sphi 0, %s96
      %s97 = sphi 0, %s94
      %s98 = sphi 0, %s97
      %s114 = sphi 0, %s98
      %s120 = sphi 0, %s122
      %s123 = sphi 0, %s120
      %s124 = sphi 0, %s123
      %s140 = sphi 0, %s124
      %s144 = sphi 0, %s144
      %s146 = sphi 0, %s144
      %s147 = sphi 0, %s146
      %s161 = sphi 0, %s147
      %s165 = sphi 0, %s165
      %s167 = sphi 0, %s165
      %s168 = sphi 0, %s167
      %s182 = sphi 0, %s168
      %s186 = sphi 0, %s186
      %s188 = sphi 0, %s186
      %s189 = sphi 0, %s188
      %s203 = sphi 0, %s189
      %s207 = sphi 0, %s207
      %s209 = sphi 0, %s207
      %s210 = sphi 0, %s209
      %s224 = sphi 0, %s210
      %s230 = sphi 0, %s232
      %s233 = sphi 0, %s230
      %s234 = sphi 0, %s233
      %s250 = sphi 0, %s234
      %s256 = sphi 0, %s258
      %s259 = sphi 0, %s256
      %s260 = sphi 0, %s259
      %s276 = sphi 0, %s260
    $region4: #{tpu_custom_call.1} parent=1 // loop_header_branch
      %35 = sbr.rel (%p33) target = $region8
    $region5: #{tpu_custom_call.1} parent=1 // loop_body
      %s37 = ssub.s32 %s32, 1
      %s38 = ssub.s32 %s32, 2
      %s39 = sadd.s32 %s32, 1
      %s40 = ssub.s32 %s32, %s39
      %p41 = scmp.eq.s32.totalorder %s40, 0
      %s43 = sadd.s32 %s42, 1
      %s44 = scalar_select %p41, %s42, %s43
      %p47 = pneg %p41
      %p48 = scmp.eq.s32.totalorder %s32, 1
      %p49 = por %p47, %p48
      %p50 = scmp.ne.s32.totalorder %s42, %s45
      %p51 = scmp.eq.s32.totalorder %s32, 0
      %p52 = por %p50, %p51
      %p53 = scmp.ne.s32.totalorder %s42, %s45
      %p54 = scmp.eq.s32.totalorder %s37, 1
      %p55 = por %p53, %p54
      %p56 = scmp.ne.s32.totalorder %s45, %s46
      %p57 = scmp.eq.s32.totalorder %s37, 0
      %p58 = por %p56, %p57
      %p59 = scmp.ne.s32.totalorder %s45, %s46
      %p60 = scmp.eq.s32.totalorder %s38, 1
      %p61 = por %p59, %p60
      %p63 = scmp.ne.s32.totalorder %s46, %s62
      %p64 = scmp.eq.s32.totalorder %s38, 0
      %p65 = por %p63, %p64
      %s66 = ssub.s32 %s32, %s39
      %p67 = scmp.eq.s32.totalorder %s66, 0
      %s69 = sadd.s32 %s68, 1
      %s70 = scalar_select %p67, %s68, %s69
      %p73 = pneg %p67
      %p74 = scmp.eq.s32.totalorder %s32, 1
      %p75 = por %p73, %p74
      %p76 = scmp.ne.s32.totalorder %s68, %s71
      %p77 = scmp.eq.s32.totalorder %s32, 0
      %p78 = por %p76, %p77
      %p79 = scmp.ne.s32.totalorder %s68, %s71
      %p80 = scmp.eq.s32.totalorder %s37, 1
      %p81 = por %p79, %p80
      %p82 = scmp.ne.s32.totalorder %s71, %s72
      %p83 = scmp.eq.s32.totalorder %s37, 0
      %p84 = por %p82, %p83
      %p85 = scmp.ne.s32.totalorder %s71, %s72
      %p86 = scmp.eq.s32.totalorder %s38, 1
      %p87 = por %p85, %p86
      %p89 = scmp.ne.s32.totalorder %s72, %s88
      %p90 = scmp.eq.s32.totalorder %s38, 0
      %p91 = por %p89, %p90
      %s92 = ssub.s32 %s32, %s39
      %p93 = scmp.eq.s32.totalorder %s92, 0
      %s95 = sadd.s32 %s94, 1
      %s96 = scalar_select %p93, %s94, %s95
      %p99 = pneg %p93
      %p100 = scmp.eq.s32.totalorder %s32, 1
      %p101 = por %p99, %p100
      %p102 = scmp.ne.s32.totalorder %s94, %s97
      %p103 = scmp.eq.s32.totalorder %s32, 0
      %p104 = por %p102, %p103
      %p105 = scmp.ne.s32.totalorder %s94, %s97
      %p106 = scmp.eq.s32.totalorder %s37, 1
      %p107 = por %p105, %p106
      %p108 = scmp.ne.s32.totalorder %s97, %s98
      %p109 = scmp.eq.s32.totalorder %s37, 0
      %p110 = por %p108, %p109
      %p111 = scmp.ne.s32.totalorder %s97, %s98
      %p112 = scmp.eq.s32.totalorder %s38, 1
      %p113 = por %p111, %p112
      %p115 = scmp.ne.s32.totalorder %s98, %s114
      %p116 = scmp.eq.s32.totalorder %s38, 0
      %p117 = por %p115, %p116
      %s118 = ssub.s32 %s32, %s39
      %p119 = scmp.eq.s32.totalorder %s118, 0
      %s121 = sadd.s32 %s120, 1
      %s122 = scalar_select %p119, %s120, %s121
      %p125 = pneg %p119
      %p126 = scmp.eq.s32.totalorder %s32, 1
      %p127 = por %p125, %p126
      %p128 = scmp.ne.s32.totalorder %s120, %s123
      %p129 = scmp.eq.s32.totalorder %s32, 0
      %p130 = por %p128, %p129
      %p131 = scmp.ne.s32.totalorder %s120, %s123
      %p132 = scmp.eq.s32.totalorder %s37, 1
      %p133 = por %p131, %p132
      %p134 = scmp.ne.s32.totalorder %s123, %s124
      %p135 = scmp.eq.s32.totalorder %s37, 0
      %p136 = por %p134, %p135
      %p137 = scmp.ne.s32.totalorder %s123, %s124
      %p138 = scmp.eq.s32.totalorder %s38, 1
      %p139 = por %p137, %p138
      %p141 = scmp.ne.s32.totalorder %s124, %s140
      %p142 = scmp.eq.s32.totalorder %s38, 0
      %p143 = por %p141, %p142
      %s145 = sadd.s32 %s144, 1
      %p148 = scmp.eq.s32.totalorder %s32, 1
      %p149 = scmp.ne.s32.totalorder %s144, %s146
      %p150 = scmp.eq.s32.totalorder %s32, 0
      %p151 = por %p149, %p150
      %p152 = scmp.ne.s32.totalorder %s144, %s146
      %p153 = scmp.eq.s32.totalorder %s37, 1
      %p154 = por %p152, %p153
      %p155 = scmp.ne.s32.totalorder %s146, %s147
      %p156 = scmp.eq.s32.totalorder %s37, 0
      %p157 = por %p155, %p156
      %p158 = scmp.ne.s32.totalorder %s146, %s147
      %p159 = scmp.eq.s32.totalorder %s38, 1
      %p160 = por %p158, %p159
      %p162 = scmp.ne.s32.totalorder %s147, %s161
      %p163 = scmp.eq.s32.totalorder %s38, 0
      %p164 = por %p162, %p163
      %s166 = sadd.s32 %s165, 1
      %p169 = scmp.eq.s32.totalorder %s32, 1
      %p170 = scmp.ne.s32.totalorder %s165, %s167
      %p171 = scmp.eq.s32.totalorder %s32, 0
      %p172 = por %p170, %p171
      %p173 = scmp.ne.s32.totalorder %s165, %s167
      %p174 = scmp.eq.s32.totalorder %s37, 1
      %p175 = por %p173, %p174
      %p176 = scmp.ne.s32.totalorder %s167, %s168
      %p177 = scmp.eq.s32.totalorder %s37, 0
      %p178 = por %p176, %p177
      %p179 = scmp.ne.s32.totalorder %s167, %s168
      %p180 = scmp.eq.s32.totalorder %s38, 1
      %p181 = por %p179, %p180
      %p183 = scmp.ne.s32.totalorder %s168, %s182
      %p184 = scmp.eq.s32.totalorder %s38, 0
      %p185 = por %p183, %p184
      %s187 = sadd.s32 %s186, 1
      %p190 = scmp.eq.s32.totalorder %s32, 1
      %p191 = scmp.ne.s32.totalorder %s186, %s188
      %p192 = scmp.eq.s32.totalorder %s32, 0
      %p193 = por %p191, %p192
      %p194 = scmp.ne.s32.totalorder %s186, %s188
      %p195 = scmp.eq.s32.totalorder %s37, 1
      %p196 = por %p194, %p195
      %p197 = scmp.ne.s32.totalorder %s188, %s189
      %p198 = scmp.eq.s32.totalorder %s37, 0
      %p199 = por %p197, %p198
      %p200 = scmp.ne.s32.totalorder %s188, %s189
      %p201 = scmp.eq.s32.totalorder %s38, 1
      %p202 = por %p200, %p201
      %p204 = scmp.ne.s32.totalorder %s189, %s203
      %p205 = scmp.eq.s32.totalorder %s38, 0
      %p206 = por %p204, %p205
      %s208 = sadd.s32 %s207, 1
      %p211 = scmp.eq.s32.totalorder %s32, 1
      %p212 = scmp.ne.s32.totalorder %s207, %s209
      %p213 = scmp.eq.s32.totalorder %s32, 0
      %p214 = por %p212, %p213
      %p215 = scmp.ne.s32.totalorder %s207, %s209
      %p216 = scmp.eq.s32.totalorder %s37, 1
      %p217 = por %p215, %p216
      %p218 = scmp.ne.s32.totalorder %s209, %s210
      %p219 = scmp.eq.s32.totalorder %s37, 0
      %p220 = por %p218, %p219
      %p221 = scmp.ne.s32.totalorder %s209, %s210
      %p222 = scmp.eq.s32.totalorder %s38, 1
      %p223 = por %p221, %p222
      %p225 = scmp.ne.s32.totalorder %s210, %s224
      %p226 = scmp.eq.s32.totalorder %s38, 0
      %p227 = por %p225, %p226
      %s228 = ssub.s32 %s32, %s39
      %p229 = scmp.eq.s32.totalorder %s228, 0
      %s231 = sadd.s32 %s230, 1
      %s232 = scalar_select %p229, %s230, %s231
      %p235 = pneg %p229
      %p236 = scmp.eq.s32.totalorder %s32, 1
      %p237 = por %p235, %p236
      %p238 = scmp.ne.s32.totalorder %s230, %s233
      %p239 = scmp.eq.s32.totalorder %s32, 0
      %p240 = por %p238, %p239
      %p241 = scmp.ne.s32.totalorder %s230, %s233
      %p242 = scmp.eq.s32.totalorder %s37, 1
      %p243 = por %p241, %p242
      %p244 = scmp.ne.s32.totalorder %s233, %s234
      %p245 = scmp.eq.s32.totalorder %s37, 0
      %p246 = por %p244, %p245
      %p247 = scmp.ne.s32.totalorder %s233, %s234
      %p248 = scmp.eq.s32.totalorder %s38, 1
      %p249 = por %p247, %p248
      %p251 = scmp.ne.s32.totalorder %s234, %s250
      %p252 = scmp.eq.s32.totalorder %s38, 0
      %p253 = por %p251, %p252
      %s254 = ssub.s32 %s32, %s39
      %p255 = scmp.eq.s32.totalorder %s254, 0
      %s257 = sadd.s32 %s256, 1
      %s258 = scalar_select %p255, %s256, %s257
      %p261 = pneg %p255
      %p262 = scmp.eq.s32.totalorder %s32, 1
      %p263 = por %p261, %p262
      %p264 = scmp.ne.s32.totalorder %s256, %s259
      %p265 = scmp.eq.s32.totalorder %s32, 0
      %p266 = por %p264, %p265
      %p267 = scmp.ne.s32.totalorder %s256, %s259
      %p268 = scmp.eq.s32.totalorder %s37, 1
      %p269 = por %p267, %p268
      %p270 = scmp.ne.s32.totalorder %s259, %s260
      %p271 = scmp.eq.s32.totalorder %s37, 0
      %p272 = por %p270, %p271
      %p273 = scmp.ne.s32.totalorder %s259, %s260
      %p274 = scmp.eq.s32.totalorder %s38, 1
      %p275 = por %p273, %p274
      %p277 = scmp.ne.s32.totalorder %s260, %s276
      %p278 = scmp.eq.s32.totalorder %s38, 0
      %p279 = por %p277, %p278
      %p280 = scmp.le.s32.totalorder 1, %s32
      %p281 = scmp.lt.s32.totalorder %s32, 3
      %p282 = pnand %p280, %p281
      %p283 = pneg %p282
      // Predicated region
      $region9: #{tpu_custom_call.1} parent=5 // pred_check
        _
      $region10: #{tpu_custom_call.1} parent=5 // pred_check_branch
        %285 = sbr.rel (%p282) target = $region12
      $region11: #{tpu_custom_call.1} parent=5 // pred_region
        %s286 = ssub.s32 %s32, 1
        // Predicated region
        $region13: #{tpu_custom_call.1} parent=11 // pred_check
          %p287 = pneg %p157
        $region14: #{tpu_custom_call.1} parent=11 // pred_check_branch
          %289 = sbr.rel (%p287) target = $region16
        $region15: #{tpu_custom_call.1} parent=11 // pred_region
          %s291 = ssub.s32 512, 512
          %292 = vsyncadd [#allocation9], %s291
          %s293 = sshll.u32 [#allocation10], 4
          %s294 = int_to_ptr.vmem [resolvable:$true] %s293
          %299 = dma.hbm_to_vmem [thread:$0]  %s4, 512, %s294, [#allocation9], 128, 128, 8
        $region16: #{tpu_custom_call.1} parent=11 // pred_fallthru
          _
        // Predicated region
        $region17: #{tpu_custom_call.1} parent=11 // pred_check
          %p300 = pneg %p178
        $region18: #{tpu_custom_call.1} parent=11 // pred_check_branch
          %302 = sbr.rel (%p300) target = $region20
        $region19: #{tpu_custom_call.1} parent=11 // pred_region
          %s304 = ssub.s32 512, 512
          %305 = vsyncadd [#allocation12], %s304
          %s306 = sshll.u32 [#allocation11], 4
          %s307 = int_to_ptr.vmem [resolvable:$true] %s306
          %312 = dma.hbm_to_vmem [thread:$0]  %s5, 512, %s307, [#allocation12], 128, 128, 8
        $region20: #{tpu_custom_call.1} parent=11 // pred_fallthru
          _
        // Predicated region
        $region21: #{tpu_custom_call.1} parent=11 // pred_check
          %p313 = pneg %p199
        $region22: #{tpu_custom_call.1} parent=11 // pred_check_branch
          %315 = sbr.rel (%p313) target = $region24
        $region23: #{tpu_custom_call.1} parent=11 // pred_region
          _
        $region24: #{tpu_custom_call.1} parent=11 // pred_fallthru
          _
        // Predicated region
        $region25: #{tpu_custom_call.1} parent=11 // pred_check
          %p316 = pneg %p220
        $region26: #{tpu_custom_call.1} parent=11 // pred_check_branch
          %318 = sbr.rel (%p316) target = $region28
        $region27: #{tpu_custom_call.1} parent=11 // pred_region
          _
        $region28: #{tpu_custom_call.1} parent=11 // pred_fallthru
          _
      $region12: #{tpu_custom_call.1} parent=5 // pred_fallthru
        _
      %p319 = scmp.lt.s32.totalorder %s32, 2
      // Predicated region
      $region29: #{tpu_custom_call.1} parent=5 // pred_check
        %p320 = pneg %p319
      $region30: #{tpu_custom_call.1} parent=5 // pred_check_branch
        %322 = sbr.rel (%p320) target = $region32
      $region31: #{tpu_custom_call.1} parent=5 // pred_region
        // Predicated region
        $region33: #{tpu_custom_call.1} parent=31 // pred_check
          %p323 = pneg %p52
        $region34: #{tpu_custom_call.1} parent=31 // pred_check_branch
          %325 = sbr.rel (%p323) target = $region36
        $region35: #{tpu_custom_call.1} parent=31 // pred_region
          %s326 = sand.u32 %s42, 1
          %s327 = scalar_lea.sflag [#allocation3], %s326
          %s328 = sand.u32 %s42, 1
          %s329 = smul.addr %s328, 8
          %s330 = scalar_lea.vmem [#allocation2], %s329
          %s332 = ssub.s32 128, 128
          %333 = vsyncadd %s327, %s332
          %s334 = smul.addr %s32, 128
          %s335 = scalar_lea.hbm %s0, %s334
          %s337 = sshll.u32 %s330, 4
          %s338 = int_to_ptr.vmem [resolvable:$true] %s337
          %340 = dma.hbm_to_vmem [thread:$0]  %s335, 128, %s338, %s327
        $region36: #{tpu_custom_call.1} parent=31 // pred_fallthru
          _
        // Predicated region
        $region37: #{tpu_custom_call.1} parent=31 // pred_check
          %p341 = pneg %p78
        $region38: #{tpu_custom_call.1} parent=31 // pred_check_branch
          %343 = sbr.rel (%p341) target = $region40
        $region39: #{tpu_custom_call.1} parent=31 // pred_region
          %s344 = sand.u32 %s32, 1
          %s345 = scalar_lea.sflag [#allocation6], %s344
          %s346 = sand.u32 %s68, 1
          %s347 = smul.addr %s346, 8
          %s348 = scalar_lea.vmem [#allocation5], %s347
          %s350 = ssub.s32 128, 128
          %351 = vsyncadd %s345, %s350
          %s352 = smul.addr %s32, 128
          %s353 = scalar_lea.hbm %s1, %s352
          %s355 = sshll.u32 %s348, 4
          %s356 = int_to_ptr.vmem [resolvable:$true] %s355
          %358 = dma.hbm_to_vmem [thread:$0]  %s353, 128, %s356, %s345
        $region40: #{tpu_custom_call.1} parent=31 // pred_fallthru
          _
        // Predicated region
        $region41: #{tpu_custom_call.1} parent=31 // pred_check
          %p359 = pneg %p104
        $region42: #{tpu_custom_call.1} parent=31 // pred_check_branch
          %361 = sbr.rel (%p359) target = $region44
        $region43: #{tpu_custom_call.1} parent=31 // pred_region
          %s362 = sand.u32 %s32, 1
          %s363 = scalar_lea.sflag [#allocation6], %s362
          %s364 = sand.u32 %s94, 1
          %s365 = smul.addr %s364, 8
          %s366 = scalar_lea.vmem [#allocation7], %s365
          %s368 = ssub.s32 128, 128
          %369 = vsyncadd %s363, %s368
          %s370 = smul.addr %s32, 128
          %s371 = scalar_lea.hbm %s2, %s370
          %s373 = sshll.u32 %s366, 4
          %s374 = int_to_ptr.vmem [resolvable:$true] %s373
          %376 = dma.hbm_to_vmem [thread:$0]  %s371, 128, %s374, %s363
        $region44: #{tpu_custom_call.1} parent=31 // pred_fallthru
          _
        // Predicated region
        $region45: #{tpu_custom_call.1} parent=31 // pred_check
          %p377 = pneg %p130
        $region46: #{tpu_custom_call.1} parent=31 // pred_check_branch
          %379 = sbr.rel (%p377) target = $region48
        $region47: #{tpu_custom_call.1} parent=31 // pred_region
          %s380 = sand.u32 %s32, 1
          %s381 = scalar_lea.sflag [#allocation9], %s380
          %s382 = sand.u32 %s120, 1
          %s383 = smul.addr %s382, 8
          %s384 = scalar_lea.vmem [#allocation8], %s383
          %s386 = ssub.s32 128, 128
          %387 = vsyncadd %s381, %s386
          %s388 = smul.addr %s32, 128
          %s389 = scalar_lea.hbm %s3, %s388
          %s391 = sshll.u32 %s384, 4
          %s392 = int_to_ptr.vmem [resolvable:$true] %s391
          %394 = dma.hbm_to_vmem [thread:$0]  %s389, 128, %s392, %s381
        $region48: #{tpu_custom_call.1} parent=31 // pred_fallthru
          _
      $region32: #{tpu_custom_call.1} parent=5 // pred_fallthru
        _
      %p395 = scmp.le.s32.totalorder 1, %s32
      %p396 = scmp.lt.s32.totalorder %s32, 3
      %p397 = pnand %p395, %p396
      %p398 = pneg %p397
      // Predicated region
      $region49: #{tpu_custom_call.1} parent=5 // pred_check
        _
      $region50: #{tpu_custom_call.1} parent=5 // pred_check_branch
        %400 = sbr.rel (%p397) target = $region52
      $region51: #{tpu_custom_call.1} parent=5 // pred_region
        %s401 = ssub.s32 %s32, 1
        %s402 = sand.u32 %s45, 1
        %s403 = scalar_lea.sflag [#allocation3], %s402
        %s404 = sand.u32 %s45, 1
        %s405 = smul.addr %s404, 8
        %s406 = scalar_lea.vmem [#allocation2], %s405
        // Predicated region
        $region53: #{tpu_custom_call.1} parent=51 // pred_check
          %p407 = pneg %p58
        $region54: #{tpu_custom_call.1} parent=51 // pred_check_branch
          %409 = sbr.rel (%p407) target = $region56
        $region55: #{tpu_custom_call.1} parent=51 // pred_region
          %410 = dma.done %s403, 128
        $region56: #{tpu_custom_call.1} parent=51 // pred_fallthru
          _
        %s411 = sand.u32 %s37, 1
        %s412 = scalar_lea.sflag [#allocation6], %s411
        %s413 = sand.u32 %s71, 1
        %s414 = smul.addr %s413, 8
        %s415 = scalar_lea.vmem [#allocation5], %s414
        // Predicated region
        $region57: #{tpu_custom_call.1} parent=51 // pred_check
          %p416 = pneg %p84
        $region58: #{tpu_custom_call.1} parent=51 // pred_check_branch
          %418 = sbr.rel (%p416) target = $region60
        $region59: #{tpu_custom_call.1} parent=51 // pred_region
          %419 = dma.done %s412, 128
        $region60: #{tpu_custom_call.1} parent=51 // pred_fallthru
          _
        %s420 = sand.u32 %s37, 1
        %s421 = scalar_lea.sflag [#allocation6], %s420
        %s422 = sand.u32 %s97, 1
        %s423 = smul.addr %s422, 8
        %s424 = scalar_lea.vmem [#allocation7], %s423
        // Predicated region
        $region61: #{tpu_custom_call.1} parent=51 // pred_check
          %p425 = pneg %p110
        $region62: #{tpu_custom_call.1} parent=51 // pred_check_branch
          %427 = sbr.rel (%p425) target = $region64
        $region63: #{tpu_custom_call.1} parent=51 // pred_region
          %428 = dma.done %s421, 128
        $region64: #{tpu_custom_call.1} parent=51 // pred_fallthru
          _
        %s429 = sand.u32 %s37, 1
        %s430 = scalar_lea.sflag [#allocation9], %s429
        %s431 = sand.u32 %s123, 1
        %s432 = smul.addr %s431, 8
        %s433 = scalar_lea.vmem [#allocation8], %s432
        // Predicated region
        $region65: #{tpu_custom_call.1} parent=51 // pred_check
          %p434 = pneg %p136
        $region66: #{tpu_custom_call.1} parent=51 // pred_check_branch
          %436 = sbr.rel (%p434) target = $region68
        $region67: #{tpu_custom_call.1} parent=51 // pred_region
          %437 = dma.done %s430, 128
        $region68: #{tpu_custom_call.1} parent=51 // pred_fallthru
          _
        // Predicated region
        $region69: #{tpu_custom_call.1} parent=51 // pred_check
          %p438 = pneg %p157
        $region70: #{tpu_custom_call.1} parent=51 // pred_check_branch
          %440 = sbr.rel (%p438) target = $region72
        $region71: #{tpu_custom_call.1} parent=51 // pred_region
          %441 = dma.done [#allocation9], 512
        $region72: #{tpu_custom_call.1} parent=51 // pred_fallthru
          _
        // Predicated region
        $region73: #{tpu_custom_call.1} parent=51 // pred_check
          %p442 = pneg %p178
        $region74: #{tpu_custom_call.1} parent=51 // pred_check_branch
          %444 = sbr.rel (%p442) target = $region76
        $region75: #{tpu_custom_call.1} parent=51 // pred_region
          %445 = dma.done [#allocation12], 512
        $region76: #{tpu_custom_call.1} parent=51 // pred_fallthru
          _
        %s446 = sand.u32 %s45, 1
        %s447 = scalar_lea.sflag [#allocation3], %s446
        %s448 = sand.u32 %s45, 1
        %s449 = smul.addr %s448, 8
        %s450 = scalar_lea.vmem [#allocation2], %s449
        %p451 = pneg %p58
        %p452 = pneg %p55
        %s453 = sand.u32 %s37, 1
        %s454 = scalar_lea.sflag [#allocation6], %s453
        %s455 = sand.u32 %s71, 1
        %s456 = smul.addr %s455, 8
        %s457 = scalar_lea.vmem [#allocation5], %s456
        %p458 = pneg %p84
        %p459 = pneg %p81
        %s460 = sand.u32 %s37, 1
        %s461 = scalar_lea.sflag [#allocation6], %s460
        %s462 = sand.u32 %s97, 1
        %s463 = smul.addr %s462, 8
        %s464 = scalar_lea.vmem [#allocation7], %s463
        %p465 = pneg %p110
        %p466 = pneg %p107
        %s467 = sand.u32 %s37, 1
        %s468 = scalar_lea.sflag [#allocation9], %s467
        %s469 = sand.u32 %s123, 1
        %s470 = smul.addr %s469, 8
        %s471 = scalar_lea.vmem [#allocation8], %s470
        %p472 = pneg %p136
        %p473 = pneg %p133
        %p474 = pneg %p157
        %p475 = pneg %p154
        %p476 = pneg %p178
        %p477 = pneg %p175
        %p478 = pneg %p199
        %p479 = pneg %p196
        %p480 = pneg %p220
        %p481 = pneg %p217
        %p482 = pneg %p246
        %p483 = pneg %p243
        %s484 = sand.u32 %s233, 1
        %s485 = scalar_lea.sflag [#allocation4], %s484
        %s486 = sand.u32 %s233, 1
        %s487 = smul.addr %s486, 8
        %s488 = scalar_lea.vmem [#allocation13], %s487
        %p489 = pneg %p272
        %p490 = pneg %p269
        %s491 = sand.u32 %s259, 1
        %s492 = scalar_lea.sflag [#allocation15], %s491
        %s493 = sand.u32 %s259, 1
        %s494 = smul.addr %s493, 32
        %s495 = scalar_lea.vmem [#allocation14], %s494
        %v496 = vld [vmem:[%s406] sm:$0xff]
        %v497 = vld [vmem:[%s415] sm:$0xff]
        %v498 = vld [vmem:[%s424] sm:$0xff]
        %v499 = vld [vmem:[#allocation10] sm:$0xff]
        %v500 = vld [vmem:[#allocation10 + $0x8] sm:$0xff]
        %v501 = vld [vmem:[#allocation10 + $0x10] sm:$0xff]
        %v502 = vld [vmem:[#allocation10 + $0x18] sm:$0xff]
        %vm503 = vcmask 261120
        %v505 = vsel %vm503, %v496, 0
        %507 = vmatprep.subr.mxu0 0.0
        %508 = vmatpush1.msra.mxu0 %v499
        %509 = vmatprep.subr.mxu0 0.0
        %510 = vmatpush1.msra.mxu0 %v500
        %511 = vmatprep.subr.mxu0 0.0
        %512 = vmatpush1.msra.mxu0 %v501
        %513 = vmatprep.subr.mxu0 0.0
        %514 = vmatpush1.msra.mxu0 %v502
        %515 = vmatprep.subr.mxu0 0.0
        %516 = vmatpush1.msra.mxu0 0.0
        %517 = vmatprep.subr.mxu0 0.0
        %518 = vmatpush1.msra.mxu0 0.0
        %519 = vmatprep.subr.mxu0 0.0
        %520 = vmatpush1.msra.mxu0 0.0
        %521 = vmatprep.subr.mxu0 0.0
        %522 = vmatpush1.msra.mxu0 0.0
        %523 = vmatprep.subr.mxu0 0.0
        %524 = vmatpush1.msra.mxu0 0.0
        %525 = vmatprep.subr.mxu0 0.0
        %526 = vmatpush1.msra.mxu0 0.0
        %527 = vmatprep.subr.mxu0 0.0
        %528 = vmatpush1.msra.mxu0 0.0
        %529 = vmatprep.subr.mxu0 0.0
        %530 = vmatpush1.msra.mxu0 0.0
        %531 = vmatprep.subr.mxu0 0.0
        %532 = vmatpush1.msra.mxu0 0.0
        %533 = vmatprep.subr.mxu0 0.0
        %534 = vmatpush1.msra.mxu0 0.0
        %535 = vmatprep.subr.mxu0 0.0
        %536 = vmatpush1.msra.mxu0 0.0
        %537 = vmatprep.subr.mxu0 0.0
        %538 = vmatpush1.msra.mxu0 0.0
        %539 = vmatprep.subr.mxu0 0.0
        %540 = vmatpush1.msra.mxu0 0.0
        %541 = vmatprep.subr.mxu0 0.0
        %542 = vmatpush1.msra.mxu0 0.0
        %543 = vmatprep.subr.mxu0 0.0
        %544 = vmatpush1.msra.mxu0 0.0
        %545 = vmatprep.subr.mxu0 0.0
        %546 = vmatpush1.msra.mxu0 0.0
        %547 = vmatprep.subr.mxu0 0.0
        %548 = vmatpush1.msra.mxu0 0.0
        %549 = vmatprep.subr.mxu0 0.0
        %550 = vmatpush1.msra.mxu0 0.0
        %551 = vmatprep.subr.mxu0 0.0
        %552 = vmatpush1.msra.mxu0 0.0
        %553 = vmatprep.subr.mxu0 0.0
        %554 = vmatpush1.msra.mxu0 0.0
        %555 = vmatprep.subr.mxu0 0.0
        %556 = vmatpush1.msra.mxu0 0.0
        %557 = vmatprep.subr.mxu0 0.0
        %558 = vmatpush1.msra.mxu0 0.0
        %559 = vmatprep.subr.mxu0 0.0
        %560 = vmatpush1.msra.mxu0 0.0
        %561 = vmatprep.subr.mxu0 0.0
        %562 = vmatpush1.msra.mxu0 0.0
        %563 = vmatprep.subr.mxu0 0.0
        %564 = vmatpush1.msra.mxu0 0.0
        %565 = vmatprep.subr.mxu0 0.0
        %566 = vmatpush1.msra.mxu0 0.0
        %567 = vmatprep.subr.mxu0 0.0
        %568 = vmatpush1.msra.mxu0 0.0
        %569 = vmatprep.subr.mxu0 0.0
        %570 = vmatpush1.msra.mxu0 0.0
        %571 = vmatprep.mubr.f32.mxu0 0.0
        %572 = vmatmul.mubr.f32.gmra.mrb[0].mxu0 %v505
        %v573 = vpop.f32.mrb[0].mxu0
        %v574 = vadd.f32 0.0, %v573
        %v575 = vpop.f32.mrb[0].mxu0
        %576 = vdwg.mxu0
        %v577 = vmul.f32 %v574, 0.35355338
        %582 = vrot.lane.b32.xlu0 %v499, 96
        %v583 = vpop.permute.xlu0 %582
        %584 = vrot.lane.b32.xlu0 %v500, 96
        %v585 = vpop.permute.xlu0 %584
        %586 = vrot.lane.b32.xlu0 %v501, 96
        %v587 = vpop.permute.xlu0 %586
        %588 = vrot.lane.b32.xlu0 %v502, 96
        %v589 = vpop.permute.xlu0 %588
        %v595 = vsel %vm503, %v497, 0
        %597 = vmatprep.subr.mxu0 0.0
        %598 = vmatpush1.msra.mxu0 %v583
        %599 = vmatprep.subr.mxu0 0.0
        %600 = vmatpush1.msra.mxu0 %v585
        %601 = vmatprep.subr.mxu0 0.0
        %602 = vmatpush1.msra.mxu0 %v587
        %603 = vmatprep.subr.mxu0 0.0
        %604 = vmatpush1.msra.mxu0 %v589
        %605 = vmatprep.subr.mxu0 0.0
        %606 = vmatpush1.msra.mxu0 0.0
        %607 = vmatprep.subr.mxu0 0.0
        %608 = vmatpush1.msra.mxu0 0.0
        %609 = vmatprep.subr.mxu0 0.0
        %610 = vmatpush1.msra.mxu0 0.0
        %611 = vmatprep.subr.mxu0 0.0
        %612 = vmatpush1.msra.mxu0 0.0
        %613 = vmatprep.subr.mxu0 0.0
        %614 = vmatpush1.msra.mxu0 0.0
        %615 = vmatprep.subr.mxu0 0.0
        %616 = vmatpush1.msra.mxu0 0.0
        %617 = vmatprep.subr.mxu0 0.0
        %618 = vmatpush1.msra.mxu0 0.0
        %619 = vmatprep.subr.mxu0 0.0
        %620 = vmatpush1.msra.mxu0 0.0
        %621 = vmatprep.subr.mxu0 0.0
        %622 = vmatpush1.msra.mxu0 0.0
        %623 = vmatprep.subr.mxu0 0.0
        %624 = vmatpush1.msra.mxu0 0.0
        %625 = vmatprep.subr.mxu0 0.0
        %626 = vmatpush1.msra.mxu0 0.0
        %627 = vmatprep.subr.mxu0 0.0
        %628 = vmatpush1.msra.mxu0 0.0
        %629 = vmatprep.subr.mxu0 0.0
        %630 = vmatpush1.msra.mxu0 0.0
        %631 = vmatprep.subr.mxu0 0.0
        %632 = vmatpush1.msra.mxu0 0.0
        %633 = vmatprep.subr.mxu0 0.0
        %634 = vmatpush1.msra.mxu0 0.0
        %635 = vmatprep.subr.mxu0 0.0
        %636 = vmatpush1.msra.mxu0 0.0
        %637 = vmatprep.subr.mxu0 0.0
        %638 = vmatpush1.msra.mxu0 0.0
        %639 = vmatprep.subr.mxu0 0.0
        %640 = vmatpush1.msra.mxu0 0.0
        %641 = vmatprep.subr.mxu0 0.0
        %642 = vmatpush1.msra.mxu0 0.0
        %643 = vmatprep.subr.mxu0 0.0
        %644 = vmatpush1.msra.mxu0 0.0
        %645 = vmatprep.subr.mxu0 0.0
        %646 = vmatpush1.msra.mxu0 0.0
        %647 = vmatprep.subr.mxu0 0.0
        %648 = vmatpush1.msra.mxu0 0.0
        %649 = vmatprep.subr.mxu0 0.0
        %650 = vmatpush1.msra.mxu0 0.0
        %651 = vmatprep.subr.mxu0 0.0
        %652 = vmatpush1.msra.mxu0 0.0
        %653 = vmatprep.subr.mxu0 0.0
        %654 = vmatpush1.msra.mxu0 0.0
        %655 = vmatprep.subr.mxu0 0.0
        %656 = vmatpush1.msra.mxu0 0.0
        %657 = vmatprep.subr.mxu0 0.0
        %658 = vmatpush1.msra.mxu0 0.0
        %659 = vmatprep.subr.mxu0 0.0
        %660 = vmatpush1.msra.mxu0 0.0
        %661 = vmatprep.mubr.f32.mxu0 0.0
        %662 = vmatmul.mubr.f32.gmra.mrb[0].mxu0 %v595
        %v663 = vpop.f32.mrb[0].mxu0
        %v664 = vadd.f32 0.0, %v663
        %v665 = vpop.f32.mrb[0].mxu0
        %666 = vdwg.mxu0
        %667 = vrot.lane.b32.xlu0 %v499, 64
        %v668 = vpop.permute.xlu0 %667
        %669 = vrot.lane.b32.xlu0 %v500, 64
        %v670 = vpop.permute.xlu0 %669
        %671 = vrot.lane.b32.xlu0 %v501, 64
        %v672 = vpop.permute.xlu0 %671
        %673 = vrot.lane.b32.xlu0 %v502, 64
        %v674 = vpop.permute.xlu0 %673
        %v680 = vsel %vm503, %v498, 0
        %682 = vmatprep.subr.mxu0 0.0
        %683 = vmatpush1.msra.mxu0 %v668
        %684 = vmatprep.subr.mxu0 0.0
        %685 = vmatpush1.msra.mxu0 %v670
        %686 = vmatprep.subr.mxu0 0.0
        %687 = vmatpush1.msra.mxu0 %v672
        %688 = vmatprep.subr.mxu0 0.0
        %689 = vmatpush1.msra.mxu0 %v674
        %690 = vmatprep.subr.mxu0 0.0
        %691 = vmatpush1.msra.mxu0 0.0
        %692 = vmatprep.subr.mxu0 0.0
        %693 = vmatpush1.msra.mxu0 0.0
        %694 = vmatprep.subr.mxu0 0.0
        %695 = vmatpush1.msra.mxu0 0.0
        %696 = vmatprep.subr.mxu0 0.0
        %697 = vmatpush1.msra.mxu0 0.0
        %698 = vmatprep.subr.mxu0 0.0
        %699 = vmatpush1.msra.mxu0 0.0
        %700 = vmatprep.subr.mxu0 0.0
        %701 = vmatpush1.msra.mxu0 0.0
        %702 = vmatprep.subr.mxu0 0.0
        %703 = vmatpush1.msra.mxu0 0.0
        %704 = vmatprep.subr.mxu0 0.0
        %705 = vmatpush1.msra.mxu0 0.0
        %706 = vmatprep.subr.mxu0 0.0
        %707 = vmatpush1.msra.mxu0 0.0
        %708 = vmatprep.subr.mxu0 0.0
        %709 = vmatpush1.msra.mxu0 0.0
        %710 = vmatprep.subr.mxu0 0.0
        %711 = vmatpush1.msra.mxu0 0.0
        %712 = vmatprep.subr.mxu0 0.0
        %713 = vmatpush1.msra.mxu0 0.0
        %714 = vmatprep.subr.mxu0 0.0
        %715 = vmatpush1.msra.mxu0 0.0
        %716 = vmatprep.subr.mxu0 0.0
        %717 = vmatpush1.msra.mxu0 0.0
        %718 = vmatprep.subr.mxu0 0.0
        %719 = vmatpush1.msra.mxu0 0.0
        %720 = vmatprep.subr.mxu0 0.0
        %721 = vmatpush1.msra.mxu0 0.0
        %722 = vmatprep.subr.mxu0 0.0
        %723 = vmatpush1.msra.mxu0 0.0
        %724 = vmatprep.subr.mxu0 0.0
        %725 = vmatpush1.msra.mxu0 0.0
        %726 = vmatprep.subr.mxu0 0.0
        %727 = vmatpush1.msra.mxu0 0.0
        %728 = vmatprep.subr.mxu0 0.0
        %729 = vmatpush1.msra.mxu0 0.0
        %730 = vmatprep.subr.mxu0 0.0
        %731 = vmatpush1.msra.mxu0 0.0
        %732 = vmatprep.subr.mxu0 0.0
        %733 = vmatpush1.msra.mxu0 0.0
        %734 = vmatprep.subr.mxu0 0.0
        %735 = vmatpush1.msra.mxu0 0.0
        %736 = vmatprep.subr.mxu0 0.0
        %737 = vmatpush1.msra.mxu0 0.0
        %738 = vmatprep.subr.mxu0 0.0
        %739 = vmatpush1.msra.mxu0 0.0
        %740 = vmatprep.subr.mxu0 0.0
        %741 = vmatpush1.msra.mxu0 0.0
        %742 = vmatprep.subr.mxu0 0.0
        %743 = vmatpush1.msra.mxu0 0.0
        %744 = vmatprep.subr.mxu0 0.0
        %745 = vmatpush1.msra.mxu0 0.0
        %746 = vmatprep.mubr.f32.mxu0 0.0
        %747 = vmatmul.mubr.f32.gmra.mrb[0].mxu0 %v680
        %v748 = vpop.f32.mrb[0].mxu0
        %v749 = vadd.f32 0.0, %v748
        %v750 = vpop.f32.mrb[0].mxu0
        %751 = vdwg.mxu0
        %753 = vrot.lane.b32.xlu0 %v577, 120
        %v754 = vpop.permute.xlu0 %753
        %755 = vrot.lane.b32.xlu0 %v577, 112
        %v756 = vpop.permute.xlu0 %755
        %757 = vrot.lane.b32.xlu0 %v577, 104
        %v758 = vpop.permute.xlu0 %757
        %760 = vrot.lane.b32.xlu0 %v664, 120
        %v761 = vpop.permute.xlu0 %760
        %762 = vrot.lane.b32.xlu0 %v664, 112
        %v763 = vpop.permute.xlu0 %762
        %764 = vrot.lane.b32.xlu0 %v664, 104
        %v765 = vpop.permute.xlu0 %764
        %767 = vrot.lane.b32.xlu0 %v749, 120
        %v768 = vpop.permute.xlu0 %767
        %770 = vrot.lane.b32.xlu0 %v749, 112
        %v771 = vpop.permute.xlu0 %770
        %773 = vrot.lane.b32.xlu0 %v749, 104
        %v774 = vpop.permute.xlu0 %773
        %v776 = vld [vmem:[%s433] sm:$0xff]
        %vm777 = vcmp.ne.f32.partialorder %v776, 0.0
        %v778 = vsel %vm777, -1e+09, 0.0
        %vm779 = vcmask 64512
        %v780 = vsel %vm779, %v577, 0
        %v782 = vsel %vm779, %v664, 0
        %784 = vmatprep.subr.mxu0 0.0
        %785 = vmatpush1.xpose.msra.mxu0 %v782
        %786 = vmatprep.subr.mxu0 0.0
        %787 = vmatpush1.xpose.msra.mxu0 0.0
        %788 = vmatprep.subr.mxu0 0.0
        %789 = vmatpush1.xpose.msra.mxu0 0.0
        %790 = vmatprep.subr.mxu0 0.0
        %791 = vmatpush1.xpose.msra.mxu0 0.0
        %792 = vmatprep.subr.mxu0 0.0
        %793 = vmatpush1.xpose.msra.mxu0 0.0
        %794 = vmatprep.subr.mxu0 0.0
        %795 = vmatpush1.xpose.msra.mxu0 0.0
        %796 = vmatprep.subr.mxu0 0.0
        %797 = vmatpush1.xpose.msra.mxu0 0.0
        %798 = vmatprep.subr.mxu0 0.0
        %799 = vmatpush1.xpose.msra.mxu0 0.0
        %800 = vmatprep.subr.mxu0 0.0
        %801 = vmatpush1.xpose.msra.mxu0 0.0
        %802 = vmatprep.subr.mxu0 0.0
        %803 = vmatpush1.xpose.msra.mxu0 0.0
        %804 = vmatprep.subr.mxu0 0.0
        %805 = vmatpush1.xpose.msra.mxu0 0.0
        %806 = vmatprep.subr.mxu0 0.0
        %807 = vmatpush1.xpose.msra.mxu0 0.0
        %808 = vmatprep.subr.mxu0 0.0
        %809 = vmatpush1.xpose.msra.mxu0 0.0
        %810 = vmatprep.subr.mxu0 0.0
        %811 = vmatpush1.xpose.msra.mxu0 0.0
        %812 = vmatprep.subr.mxu0 0.0
        %813 = vmatpush1.xpose.msra.mxu0 0.0
        %814 = vmatprep.subr.mxu0 0.0
        %815 = vmatpush1.xpose.msra.mxu0 0.0
        %816 = vmatprep.subr.mxu0 0.0
        %817 = vmatpush1.xpose.msra.mxu0 0.0
        %818 = vmatprep.subr.mxu0 0.0
        %819 = vmatpush1.xpose.msra.mxu0 0.0
        %820 = vmatprep.subr.mxu0 0.0
        %821 = vmatpush1.xpose.msra.mxu0 0.0
        %822 = vmatprep.subr.mxu0 0.0
        %823 = vmatpush1.xpose.msra.mxu0 0.0
        %824 = vmatprep.subr.mxu0 0.0
        %825 = vmatpush1.xpose.msra.mxu0 0.0
        %826 = vmatprep.subr.mxu0 0.0
        %827 = vmatpush1.xpose.msra.mxu0 0.0
        %828 = vmatprep.subr.mxu0 0.0
        %829 = vmatpush1.xpose.msra.mxu0 0.0
        %830 = vmatprep.subr.mxu0 0.0
        %831 = vmatpush1.xpose.msra.mxu0 0.0
        %832 = vmatprep.subr.mxu0 0.0
        %833 = vmatpush1.xpose.msra.mxu0 0.0
        %834 = vmatprep.subr.mxu0 0.0
        %835 = vmatpush1.xpose.msra.mxu0 0.0
        %836 = vmatprep.subr.mxu0 0.0
        %837 = vmatpush1.xpose.msra.mxu0 0.0
        %838 = vmatprep.subr.mxu0 0.0
        %839 = vmatpush1.xpose.msra.mxu0 0.0
        %840 = vmatprep.subr.mxu0 0.0
        %841 = vmatpush1.xpose.msra.mxu0 0.0
        %842 = vmatprep.subr.mxu0 0.0
        %843 = vmatpush1.xpose.msra.mxu0 0.0
        %844 = vmatprep.subr.mxu0 0.0
        %845 = vmatpush1.xpose.msra.mxu0 0.0
        %846 = vmatprep.subr.mxu0 0.0
        %847 = vmatpush1.xpose.msra.mxu0 0.0
        %848 = vmatprep.mubr.f32.mxu0 0.0
        %849 = vmatmul.mubr.f32.gmra.mrb[0].mxu0 %v780
        %v850 = vpop.f32.mrb[0].mxu0
        %v851 = vadd.f32 %v778, %v850
        %v852 = vpop.f32.mrb[0].mxu0
        %853 = vdwg.mxu0
        %v854 = vsel %vm779, %v754, 0
        %v856 = vsel %vm779, %v761, 0
        %858 = vmatprep.subr.mxu0 0.0
        %859 = vmatpush1.xpose.msra.mxu0 %v856
        %860 = vmatprep.subr.mxu0 0.0
        %861 = vmatpush1.xpose.msra.mxu0 0.0
        %862 = vmatprep.subr.mxu0 0.0
        %863 = vmatpush1.xpose.msra.mxu0 0.0
        %864 = vmatprep.subr.mxu0 0.0
        %865 = vmatpush1.xpose.msra.mxu0 0.0
        %866 = vmatprep.subr.mxu0 0.0
        %867 = vmatpush1.xpose.msra.mxu0 0.0
        %868 = vmatprep.subr.mxu0 0.0
        %869 = vmatpush1.xpose.msra.mxu0 0.0
        %870 = vmatprep.subr.mxu0 0.0
        %871 = vmatpush1.xpose.msra.mxu0 0.0
        %872 = vmatprep.subr.mxu0 0.0
        %873 = vmatpush1.xpose.msra.mxu0 0.0
        %874 = vmatprep.subr.mxu0 0.0
        %875 = vmatpush1.xpose.msra.mxu0 0.0
        %876 = vmatprep.subr.mxu0 0.0
        %877 = vmatpush1.xpose.msra.mxu0 0.0
        %878 = vmatprep.subr.mxu0 0.0
        %879 = vmatpush1.xpose.msra.mxu0 0.0
        %880 = vmatprep.subr.mxu0 0.0
        %881 = vmatpush1.xpose.msra.mxu0 0.0
        %882 = vmatprep.subr.mxu0 0.0
        %883 = vmatpush1.xpose.msra.mxu0 0.0
        %884 = vmatprep.subr.mxu0 0.0
        %885 = vmatpush1.xpose.msra.mxu0 0.0
        %886 = vmatprep.subr.mxu0 0.0
        %887 = vmatpush1.xpose.msra.mxu0 0.0
        %888 = vmatprep.subr.mxu0 0.0
        %889 = vmatpush1.xpose.msra.mxu0 0.0
        %890 = vmatprep.subr.mxu0 0.0
        %891 = vmatpush1.xpose.msra.mxu0 0.0
        %892 = vmatprep.subr.mxu0 0.0
        %893 = vmatpush1.xpose.msra.mxu0 0.0
        %894 = vmatprep.subr.mxu0 0.0
        %895 = vmatpush1.xpose.msra.mxu0 0.0
        %896 = vmatprep.subr.mxu0 0.0
        %897 = vmatpush1.xpose.msra.mxu0 0.0
        %898 = vmatprep.subr.mxu0 0.0
        %899 = vmatpush1.xpose.msra.mxu0 0.0
        %900 = vmatprep.subr.mxu0 0.0
        %901 = vmatpush1.xpose.msra.mxu0 0.0
        %902 = vmatprep.subr.mxu0 0.0
        %903 = vmatpush1.xpose.msra.mxu0 0.0
        %904 = vmatprep.subr.mxu0 0.0
        %905 = vmatpush1.xpose.msra.mxu0 0.0
        %906 = vmatprep.subr.mxu0 0.0
        %907 = vmatpush1.xpose.msra.mxu0 0.0
        %908 = vmatprep.subr.mxu0 0.0
        %909 = vmatpush1.xpose.msra.mxu0 0.0
        %910 = vmatprep.subr.mxu0 0.0
        %911 = vmatpush1.xpose.msra.mxu0 0.0
        %912 = vmatprep.subr.mxu0 0.0
        %913 = vmatpush1.xpose.msra.mxu0 0.0
        %914 = vmatprep.subr.mxu0 0.0
        %915 = vmatpush1.xpose.msra.mxu0 0.0
        %916 = vmatprep.subr.mxu0 0.0
        %917 = vmatpush1.xpose.msra.mxu0 0.0
        %918 = vmatprep.subr.mxu0 0.0
        %919 = vmatpush1.xpose.msra.mxu0 0.0
        %920 = vmatprep.subr.mxu0 0.0
        %921 = vmatpush1.xpose.msra.mxu0 0.0
        %922 = vmatprep.mubr.f32.mxu0 0.0
        %923 = vmatmul.mubr.f32.gmra.mrb[0].mxu0 %v854
        %v924 = vpop.f32.mrb[0].mxu0
        %v925 = vadd.f32 %v778, %v924
        %v926 = vpop.f32.mrb[0].mxu0
        %927 = vdwg.mxu0
        %v928 = vsel %vm779, %v756, 0
        %v930 = vsel %vm779, %v763, 0
        %932 = vmatprep.subr.mxu0 0.0
        %933 = vmatpush1.xpose.msra.mxu0 %v930
        %934 = vmatprep.subr.mxu0 0.0
        %935 = vmatpush1.xpose.msra.mxu0 0.0
        %936 = vmatprep.subr.mxu0 0.0
        %937 = vmatpush1.xpose.msra.mxu0 0.0
        %938 = vmatprep.subr.mxu0 0.0
        %939 = vmatpush1.xpose.msra.mxu0 0.0
        %940 = vmatprep.subr.mxu0 0.0
        %941 = vmatpush1.xpose.msra.mxu0 0.0
        %942 = vmatprep.subr.mxu0 0.0
        %943 = vmatpush1.xpose.msra.mxu0 0.0
        %944 = vmatprep.subr.mxu0 0.0
        %945 = vmatpush1.xpose.msra.mxu0 0.0
        %946 = vmatprep.subr.mxu0 0.0
        %947 = vmatpush1.xpose.msra.mxu0 0.0
        %948 = vmatprep.subr.mxu0 0.0
        %949 = vmatpush1.xpose.msra.mxu0 0.0
        %950 = vmatprep.subr.mxu0 0.0
        %951 = vmatpush1.xpose.msra.mxu0 0.0
        %952 = vmatprep.subr.mxu0 0.0
        %953 = vmatpush1.xpose.msra.mxu0 0.0
        %954 = vmatprep.subr.mxu0 0.0
        %955 = vmatpush1.xpose.msra.mxu0 0.0
        %956 = vmatprep.subr.mxu0 0.0
        %957 = vmatpush1.xpose.msra.mxu0 0.0
        %958 = vmatprep.subr.mxu0 0.0
        %959 = vmatpush1.xpose.msra.mxu0 0.0
        %960 = vmatprep.subr.mxu0 0.0
        %961 = vmatpush1.xpose.msra.mxu0 0.0
        %962 = vmatprep.subr.mxu0 0.0
        %963 = vmatpush1.xpose.msra.mxu0 0.0
        %964 = vmatprep.subr.mxu0 0.0
        %965 = vmatpush1.xpose.msra.mxu0 0.0
        %966 = vmatprep.subr.mxu0 0.0
        %967 = vmatpush1.xpose.msra.mxu0 0.0
        %968 = vmatprep.subr.mxu0 0.0
        %969 = vmatpush1.xpose.msra.mxu0 0.0
        %970 = vmatprep.subr.mxu0 0.0
        %971 = vmatpush1.xpose.msra.mxu0 0.0
        %972 = vmatprep.subr.mxu0 0.0
        %973 = vmatpush1.xpose.msra.mxu0 0.0
        %974 = vmatprep.subr.mxu0 0.0
        %975 = vmatpush1.xpose.msra.mxu0 0.0
        %976 = vmatprep.subr.mxu0 0.0
        %977 = vmatpush1.xpose.msra.mxu0 0.0
        %978 = vmatprep.subr.mxu0 0.0
        %979 = vmatpush1.xpose.msra.mxu0 0.0
        %980 = vmatprep.subr.mxu0 0.0
        %981 = vmatpush1.xpose.msra.mxu0 0.0
        %982 = vmatprep.subr.mxu0 0.0
        %983 = vmatpush1.xpose.msra.mxu0 0.0
        %984 = vmatprep.subr.mxu0 0.0
        %985 = vmatpush1.xpose.msra.mxu0 0.0
        %986 = vmatprep.subr.mxu0 0.0
        %987 = vmatpush1.xpose.msra.mxu0 0.0
        %988 = vmatprep.subr.mxu0 0.0
        %989 = vmatpush1.xpose.msra.mxu0 0.0
        %990 = vmatprep.subr.mxu0 0.0
        %991 = vmatpush1.xpose.msra.mxu0 0.0
        %992 = vmatprep.subr.mxu0 0.0
        %993 = vmatpush1.xpose.msra.mxu0 0.0
        %994 = vmatprep.subr.mxu0 0.0
        %995 = vmatpush1.xpose.msra.mxu0 0.0
        %996 = vmatprep.mubr.f32.mxu0 0.0
        %997 = vmatmul.mubr.f32.gmra.mrb[0].mxu0 %v928
        %v998 = vpop.f32.mrb[0].mxu0
        %v999 = vadd.f32 %v778, %v998
        %v1000 = vpop.f32.mrb[0].mxu0
        %1001 = vdwg.mxu0
        %v1002 = vsel %vm779, %v758, 0
        %v1004 = vsel %vm779, %v765, 0
        %1006 = vmatprep.subr.mxu0 0.0
        %1007 = vmatpush1.xpose.msra.mxu0 %v1004
        %1008 = vmatprep.subr.mxu0 0.0
        %1009 = vmatpush1.xpose.msra.mxu0 0.0
        %1010 = vmatprep.subr.mxu0 0.0
        %1011 = vmatpush1.xpose.msra.mxu0 0.0
        %1012 = vmatprep.subr.mxu0 0.0
        %1013 = vmatpush1.xpose.msra.mxu0 0.0
        %1014 = vmatprep.subr.mxu0 0.0
        %1015 = vmatpush1.xpose.msra.mxu0 0.0
        %1016 = vmatprep.subr.mxu0 0.0
        %1017 = vmatpush1.xpose.msra.mxu0 0.0
        %1018 = vmatprep.subr.mxu0 0.0
        %1019 = vmatpush1.xpose.msra.mxu0 0.0
        %1020 = vmatprep.subr.mxu0 0.0
        %1021 = vmatpush1.xpose.msra.mxu0 0.0
        %1022 = vmatprep.subr.mxu0 0.0
        %1023 = vmatpush1.xpose.msra.mxu0 0.0
        %1024 = vmatprep.subr.mxu0 0.0
        %1025 = vmatpush1.xpose.msra.mxu0 0.0
        %1026 = vmatprep.subr.mxu0 0.0
        %1027 = vmatpush1.xpose.msra.mxu0 0.0
        %1028 = vmatprep.subr.mxu0 0.0
        %1029 = vmatpush1.xpose.msra.mxu0 0.0
        %1030 = vmatprep.subr.mxu0 0.0
        %1031 = vmatpush1.xpose.msra.mxu0 0.0
        %1032 = vmatprep.subr.mxu0 0.0
        %1033 = vmatpush1.xpose.msra.mxu0 0.0
        %1034 = vmatprep.subr.mxu0 0.0
        %1035 = vmatpush1.xpose.msra.mxu0 0.0
        %1036 = vmatprep.subr.mxu0 0.0
        %1037 = vmatpush1.xpose.msra.mxu0 0.0
        %1038 = vmatprep.subr.mxu0 0.0
        %1039 = vmatpush1.xpose.msra.mxu0 0.0
        %1040 = vmatprep.subr.mxu0 0.0
        %1041 = vmatpush1.xpose.msra.mxu0 0.0
        %1042 = vmatprep.subr.mxu0 0.0
        %1043 = vmatpush1.xpose.msra.mxu0 0.0
        %1044 = vmatprep.subr.mxu0 0.0
        %1045 = vmatpush1.xpose.msra.mxu0 0.0
        %1046 = vmatprep.subr.mxu0 0.0
        %1047 = vmatpush1.xpose.msra.mxu0 0.0
        %1048 = vmatprep.subr.mxu0 0.0
        %1049 = vmatpush1.xpose.msra.mxu0 0.0
        %1050 = vmatprep.subr.mxu0 0.0
        %1051 = vmatpush1.xpose.msra.mxu0 0.0
        %1052 = vmatprep.subr.mxu0 0.0
        %1053 = vmatpush1.xpose.msra.mxu0 0.0
        %1054 = vmatprep.subr.mxu0 0.0
        %1055 = vmatpush1.xpose.msra.mxu0 0.0
        %1056 = vmatprep.subr.mxu0 0.0
        %1057 = vmatpush1.xpose.msra.mxu0 0.0
        %1058 = vmatprep.subr.mxu0 0.0
        %1059 = vmatpush1.xpose.msra.mxu0 0.0
        %1060 = vmatprep.subr.mxu0 0.0
        %1061 = vmatpush1.xpose.msra.mxu0 0.0
        %1062 = vmatprep.subr.mxu0 0.0
        %1063 = vmatpush1.xpose.msra.mxu0 0.0
        %1064 = vmatprep.subr.mxu0 0.0
        %1065 = vmatpush1.xpose.msra.mxu0 0.0
        %1066 = vmatprep.subr.mxu0 0.0
        %1067 = vmatpush1.xpose.msra.mxu0 0.0
        %1068 = vmatprep.subr.mxu0 0.0
        %1069 = vmatpush1.xpose.msra.mxu0 0.0
        %1070 = vmatprep.mubr.f32.mxu0 0.0
        %1071 = vmatmul.mubr.f32.gmra.mrb[0].mxu0 %v1002
        %v1072 = vpop.f32.mrb[0].mxu0
        %v1073 = vadd.f32 %v778, %v1072
        %v1074 = vpop.f32.mrb[0].mxu0
        %1075 = vdwg.mxu0
        %v1076 = vsel %vm779, %v851, -inf
        %1077 = vmax.xlane.f32.xlu0 %v1076
        %v1078 = vpop.xlane.xlu0 %1077
        %v1079 = vsel %vm779, %v925, -inf
        %1080 = vmax.xlane.f32.xlu0 %v1079
        %v1081 = vpop.xlane.xlu0 %1080
        %v1082 = vsel %vm779, %v999, -inf
        %1083 = vmax.xlane.f32.xlu0 %v1082
        %v1084 = vpop.xlane.xlu0 %1083
        %v1085 = vsel %vm779, %v1073, -inf
        %1086 = vmax.xlane.f32.xlu0 %v1085
        %v1087 = vpop.xlane.xlu0 %1086
        %v1088 = vsub.f32 %v851, %v1078
        %v1089 = vsub.f32 %v925, %v1081
        %v1090 = vsub.f32 %v999, %v1084
        %v1091 = vsub.f32 %v1073, %v1087
        %v1092 = vmul.f32 %v1088, 1.442695
        %v1093 = vpow.pop %v1092
        %v1094 = vmul.f32 %v1089, 1.442695
        %v1095 = vpow.pop %v1094
        %v1096 = vmul.f32 %v1090, 1.442695
        %v1097 = vpow.pop %v1096
        %v1098 = vmul.f32 %v1091, 1.442695
        %v1099 = vpow.pop %v1098
        %v1100 = vsel %vm779, %v1093, 0.0
        %1101 = vadd.xlane.f32.xlu0 %v1100
        %v1102 = vpop.xlane.xlu0 %1101
        %v1103 = vsel %vm779, %v1095, 0.0
        %1104 = vadd.xlane.f32.xlu0 %v1103
        %v1105 = vpop.xlane.xlu0 %1104
        %v1106 = vsel %vm779, %v1097, 0.0
        %1107 = vadd.xlane.f32.xlu0 %v1106
        %v1108 = vpop.xlane.xlu0 %1107
        %v1109 = vsel %vm779, %v1099, 0.0
        %1110 = vadd.xlane.f32.xlu0 %v1109
        %v1111 = vpop.xlane.xlu0 %1110
        %v1112 = vrcp.pop %v1102
        %v1113 = vrcp.pop %v1105
        %v1114 = vrcp.pop %v1108
        %v1115 = vrcp.pop %v1111
        %v1116 = vmul.f32 %v1102, %v1112
        %v1117 = vmul.f32 %v1105, %v1113
        %v1118 = vmul.f32 %v1108, %v1114
        %v1119 = vmul.f32 %v1111, %v1115
        %v1120 = vsub.f32 2.0, %v1116
        %v1121 = vsub.f32 2.0, %v1117
        %v1122 = vsub.f32 2.0, %v1118
        %v1123 = vsub.f32 2.0, %v1119
        %v1124 = vmul.f32 %v1112, %v1120
        %v1125 = vmul.f32 %v1113, %v1121
        %v1126 = vmul.f32 %v1114, %v1122
        %v1127 = vmul.f32 %v1115, %v1123
        %v1128 = vmul.f32 %v1093, %v1124
        %v1129 = vmul.f32 %v1095, %v1125
        %v1130 = vmul.f32 %v1097, %v1126
        %v1131 = vmul.f32 %v1099, %v1127
        %1132 = vst.msk [vmem:[%s495] sm:$0xff] %vm779, %v1128
        %1133 = vst.msk [vmem:[%s495 + $0x8] sm:$0xff] %vm779, %v1129
        %1134 = vst.msk [vmem:[%s495 + $0x10] sm:$0xff] %vm779, %v1130
        %1135 = vst.msk [vmem:[%s495 + $0x18] sm:$0xff] %vm779, %v1131
        %v1137 = vsel %vm779, %v1128, 0
        %1139 = vmatprep.subr.mxu0 0.0
        %1140 = vmatpush1.msra.mxu0 %v749
        %1141 = vmatprep.subr.mxu0 0.0
        %1142 = vmatpush1.msra.mxu0 0.0
        %1143 = vmatprep.subr.mxu0 0.0
        %1144 = vmatpush1.msra.mxu0 0.0
        %1145 = vmatprep.subr.mxu0 0.0
        %1146 = vmatpush1.msra.mxu0 0.0
        %1147 = vmatprep.subr.mxu0 0.0
        %1148 = vmatpush1.msra.mxu0 0.0
        %1149 = vmatprep.subr.mxu0 0.0
        %1150 = vmatpush1.msra.mxu0 0.0
        %1151 = vmatprep.subr.mxu0 0.0
        %1152 = vmatpush1.msra.mxu0 0.0
        %1153 = vmatprep.subr.mxu0 0.0
        %1154 = vmatpush1.msra.mxu0 0.0
        %1155 = vmatprep.subr.mxu0 0.0
        %1156 = vmatpush1.msra.mxu0 0.0
        %1157 = vmatprep.subr.mxu0 0.0
        %1158 = vmatpush1.msra.mxu0 0.0
        %1159 = vmatprep.subr.mxu0 0.0
        %1160 = vmatpush1.msra.mxu0 0.0
        %1161 = vmatprep.subr.mxu0 0.0
        %1162 = vmatpush1.msra.mxu0 0.0
        %1163 = vmatprep.subr.mxu0 0.0
        %1164 = vmatpush1.msra.mxu0 0.0
        %1165 = vmatprep.subr.mxu0 0.0
        %1166 = vmatpush1.msra.mxu0 0.0
        %1167 = vmatprep.subr.mxu0 0.0
        %1168 = vmatpush1.msra.mxu0 0.0
        %1169 = vmatprep.subr.mxu0 0.0
        %1170 = vmatpush1.msra.mxu0 0.0
        %1171 = vmatprep.subr.mxu0 0.0
        %1172 = vmatpush1.msra.mxu0 0.0
        %1173 = vmatprep.subr.mxu0 0.0
        %1174 = vmatpush1.msra.mxu0 0.0
        %1175 = vmatprep.subr.mxu0 0.0
        %1176 = vmatpush1.msra.mxu0 0.0
        %1177 = vmatprep.subr.mxu0 0.0
        %1178 = vmatpush1.msra.mxu0 0.0
        %1179 = vmatprep.subr.mxu0 0.0
        %1180 = vmatpush1.msra.mxu0 0.0
        %1181 = vmatprep.subr.mxu0 0.0
        %1182 = vmatpush1.msra.mxu0 0.0
        %1183 = vmatprep.subr.mxu0 0.0
        %1184 = vmatpush1.msra.mxu0 0.0
        %1185 = vmatprep.subr.mxu0 0.0
        %1186 = vmatpush1.msra.mxu0 0.0
        %1187 = vmatprep.subr.mxu0 0.0
        %1188 = vmatpush1.msra.mxu0 0.0
        %1189 = vmatprep.subr.mxu0 0.0
        %1190 = vmatpush1.msra.mxu0 0.0
        %1191 = vmatprep.subr.mxu0 0.0
        %1192 = vmatpush1.msra.mxu0 0.0
        %1193 = vmatprep.subr.mxu0 0.0
        %1194 = vmatpush1.msra.mxu0 0.0
        %1195 = vmatprep.subr.mxu0 0.0
        %1196 = vmatpush1.msra.mxu0 0.0
        %1197 = vmatprep.subr.mxu0 0.0
        %1198 = vmatpush1.msra.mxu0 0.0
        %1199 = vmatprep.subr.mxu0 0.0
        %1200 = vmatpush1.msra.mxu0 0.0
        %1201 = vmatprep.subr.mxu0 0.0
        %1202 = vmatpush1.msra.mxu0 0.0
        %1203 = vmatprep.mubr.f32.mxu0 0.0
        %1204 = vmatmul.mubr.f32.gmra.mrb[0].mxu0 %v1137
        %v1205 = vpop.f32.mrb[0].mxu0
        %v1206 = vadd.f32 0.0, %v1205
        %v1207 = vpop.f32.mrb[0].mxu0
        %1208 = vdwg.mxu0
        %v1210 = vsel %vm779, %v1129, 0
        %1212 = vmatprep.subr.mxu0 0.0
        %1213 = vmatpush1.msra.mxu0 %v768
        %1214 = vmatprep.subr.mxu0 0.0
        %1215 = vmatpush1.msra.mxu0 0.0
        %1216 = vmatprep.subr.mxu0 0.0
        %1217 = vmatpush1.msra.mxu0 0.0
        %1218 = vmatprep.subr.mxu0 0.0
        %1219 = vmatpush1.msra.mxu0 0.0
        %1220 = vmatprep.subr.mxu0 0.0
        %1221 = vmatpush1.msra.mxu0 0.0
        %1222 = vmatprep.subr.mxu0 0.0
        %1223 = vmatpush1.msra.mxu0 0.0
        %1224 = vmatprep.subr.mxu0 0.0
        %1225 = vmatpush1.msra.mxu0 0.0
        %1226 = vmatprep.subr.mxu0 0.0
        %1227 = vmatpush1.msra.mxu0 0.0
        %1228 = vmatprep.subr.mxu0 0.0
        %1229 = vmatpush1.msra.mxu0 0.0
        %1230 = vmatprep.subr.mxu0 0.0
        %1231 = vmatpush1.msra.mxu0 0.0
        %1232 = vmatprep.subr.mxu0 0.0
        %1233 = vmatpush1.msra.mxu0 0.0
        %1234 = vmatprep.subr.mxu0 0.0
        %1235 = vmatpush1.msra.mxu0 0.0
        %1236 = vmatprep.subr.mxu0 0.0
        %1237 = vmatpush1.msra.mxu0 0.0
        %1238 = vmatprep.subr.mxu0 0.0
        %1239 = vmatpush1.msra.mxu0 0.0
        %1240 = vmatprep.subr.mxu0 0.0
        %1241 = vmatpush1.msra.mxu0 0.0
        %1242 = vmatprep.subr.mxu0 0.0
        %1243 = vmatpush1.msra.mxu0 0.0
        %1244 = vmatprep.subr.mxu0 0.0
        %1245 = vmatpush1.msra.mxu0 0.0
        %1246 = vmatprep.subr.mxu0 0.0
        %1247 = vmatpush1.msra.mxu0 0.0
        %1248 = vmatprep.subr.mxu0 0.0
        %1249 = vmatpush1.msra.mxu0 0.0
        %1250 = vmatprep.subr.mxu0 0.0
        %1251 = vmatpush1.msra.mxu0 0.0
        %1252 = vmatprep.subr.mxu0 0.0
        %1253 = vmatpush1.msra.mxu0 0.0
        %1254 = vmatprep.subr.mxu0 0.0
        %1255 = vmatpush1.msra.mxu0 0.0
        %1256 = vmatprep.subr.mxu0 0.0
        %1257 = vmatpush1.msra.mxu0 0.0
        %1258 = vmatprep.subr.mxu0 0.0
        %1259 = vmatpush1.msra.mxu0 0.0
        %1260 = vmatprep.subr.mxu0 0.0
        %1261 = vmatpush1.msra.mxu0 0.0
        %1262 = vmatprep.subr.mxu0 0.0
        %1263 = vmatpush1.msra.mxu0 0.0
        %1264 = vmatprep.subr.mxu0 0.0
        %1265 = vmatpush1.msra.mxu0 0.0
        %1266 = vmatprep.subr.mxu0 0.0
        %1267 = vmatpush1.msra.mxu0 0.0
        %1268 = vmatprep.subr.mxu0 0.0
        %1269 = vmatpush1.msra.mxu0 0.0
        %1270 = vmatprep.subr.mxu0 0.0
        %1271 = vmatpush1.msra.mxu0 0.0
        %1272 = vmatprep.subr.mxu0 0.0
        %1273 = vmatpush1.msra.mxu0 0.0
        %1274 = vmatprep.subr.mxu0 0.0
        %1275 = vmatpush1.msra.mxu0 0.0
        %1276 = vmatprep.mubr.f32.mxu0 0.0
        %1277 = vmatmul.mubr.f32.gmra.mrb[0].mxu0 %v1210
        %v1278 = vpop.f32.mrb[0].mxu0
        %v1279 = vadd.f32 0.0, %v1278
        %v1280 = vpop.f32.mrb[0].mxu0
        %1281 = vdwg.mxu0
        %v1283 = vsel %vm779, %v1130, 0
        %1285 = vmatprep.subr.mxu0 0.0
        %1286 = vmatpush1.msra.mxu0 %v771
        %1287 = vmatprep.subr.mxu0 0.0
        %1288 = vmatpush1.msra.mxu0 0.0
        %1289 = vmatprep.subr.mxu0 0.0
        %1290 = vmatpush1.msra.mxu0 0.0
        %1291 = vmatprep.subr.mxu0 0.0
        %1292 = vmatpush1.msra.mxu0 0.0
        %1293 = vmatprep.subr.mxu0 0.0
        %1294 = vmatpush1.msra.mxu0 0.0
        %1295 = vmatprep.subr.mxu0 0.0
        %1296 = vmatpush1.msra.mxu0 0.0
        %1297 = vmatprep.subr.mxu0 0.0
        %1298 = vmatpush1.msra.mxu0 0.0
        %1299 = vmatprep.subr.mxu0 0.0
        %1300 = vmatpush1.msra.mxu0 0.0
        %1301 = vmatprep.subr.mxu0 0.0
        %1302 = vmatpush1.msra.mxu0 0.0
        %1303 = vmatprep.subr.mxu0 0.0
        %1304 = vmatpush1.msra.mxu0 0.0
        %1305 = vmatprep.subr.mxu0 0.0
        %1306 = vmatpush1.msra.mxu0 0.0
        %1307 = vmatprep.subr.mxu0 0.0
        %1308 = vmatpush1.msra.mxu0 0.0
        %1309 = vmatprep.subr.mxu0 0.0
        %1310 = vmatpush1.msra.mxu0 0.0
        %1311 = vmatprep.subr.mxu0 0.0
        %1312 = vmatpush1.msra.mxu0 0.0
        %1313 = vmatprep.subr.mxu0 0.0
        %1314 = vmatpush1.msra.mxu0 0.0
        %1315 = vmatprep.subr.mxu0 0.0
        %1316 = vmatpush1.msra.mxu0 0.0
        %1317 = vmatprep.subr.mxu0 0.0
        %1318 = vmatpush1.msra.mxu0 0.0
        %1319 = vmatprep.subr.mxu0 0.0
        %1320 = vmatpush1.msra.mxu0 0.0
        %1321 = vmatprep.subr.mxu0 0.0
        %1322 = vmatpush1.msra.mxu0 0.0
        %1323 = vmatprep.subr.mxu0 0.0
        %1324 = vmatpush1.msra.mxu0 0.0
        %1325 = vmatprep.subr.mxu0 0.0
        %1326 = vmatpush1.msra.mxu0 0.0
        %1327 = vmatprep.subr.mxu0 0.0
        %1328 = vmatpush1.msra.mxu0 0.0
        %1329 = vmatprep.subr.mxu0 0.0
        %1330 = vmatpush1.msra.mxu0 0.0
        %1331 = vmatprep.subr.mxu0 0.0
        %1332 = vmatpush1.msra.mxu0 0.0
        %1333 = vmatprep.subr.mxu0 0.0
        %1334 = vmatpush1.msra.mxu0 0.0
        %1335 = vmatprep.subr.mxu0 0.0
        %1336 = vmatpush1.msra.mxu0 0.0
        %1337 = vmatprep.subr.mxu0 0.0
        %1338 = vmatpush1.msra.mxu0 0.0
        %1339 = vmatprep.subr.mxu0 0.0
        %1340 = vmatpush1.msra.mxu0 0.0
        %1341 = vmatprep.subr.mxu0 0.0
        %1342 = vmatpush1.msra.mxu0 0.0
        %1343 = vmatprep.subr.mxu0 0.0
        %1344 = vmatpush1.msra.mxu0 0.0
        %1345 = vmatprep.subr.mxu0 0.0
        %1346 = vmatpush1.msra.mxu0 0.0
        %1347 = vmatprep.subr.mxu0 0.0
        %1348 = vmatpush1.msra.mxu0 0.0
        %1349 = vmatprep.mubr.f32.mxu0 0.0
        %1350 = vmatmul.mubr.f32.gmra.mrb[0].mxu0 %v1283
        %v1351 = vpop.f32.mrb[0].mxu0
        %v1352 = vadd.f32 0.0, %v1351
        %v1353 = vpop.f32.mrb[0].mxu0
        %1354 = vdwg.mxu0
        %v1356 = vsel %vm779, %v1131, 0
        %1358 = vmatprep.subr.mxu0 0.0
        %1359 = vmatpush1.msra.mxu0 %v774
        %1360 = vmatprep.subr.mxu0 0.0
        %1361 = vmatpush1.msra.mxu0 0.0
        %1362 = vmatprep.subr.mxu0 0.0
        %1363 = vmatpush1.msra.mxu0 0.0
        %1364 = vmatprep.subr.mxu0 0.0
        %1365 = vmatpush1.msra.mxu0 0.0
        %1366 = vmatprep.subr.mxu0 0.0
        %1367 = vmatpush1.msra.mxu0 0.0
        %1368 = vmatprep.subr.mxu0 0.0
        %1369 = vmatpush1.msra.mxu0 0.0
        %1370 = vmatprep.subr.mxu0 0.0
        %1371 = vmatpush1.msra.mxu0 0.0
        %1372 = vmatprep.subr.mxu0 0.0
        %1373 = vmatpush1.msra.mxu0 0.0
        %1374 = vmatprep.subr.mxu0 0.0
        %1375 = vmatpush1.msra.mxu0 0.0
        %1376 = vmatprep.subr.mxu0 0.0
        %1377 = vmatpush1.msra.mxu0 0.0
        %1378 = vmatprep.subr.mxu0 0.0
        %1379 = vmatpush1.msra.mxu0 0.0
        %1380 = vmatprep.subr.mxu0 0.0
        %1381 = vmatpush1.msra.mxu0 0.0
        %1382 = vmatprep.subr.mxu0 0.0
        %1383 = vmatpush1.msra.mxu0 0.0
        %1384 = vmatprep.subr.mxu0 0.0
        %1385 = vmatpush1.msra.mxu0 0.0
        %1386 = vmatprep.subr.mxu0 0.0
        %1387 = vmatpush1.msra.mxu0 0.0
        %1388 = vmatprep.subr.mxu0 0.0
        %1389 = vmatpush1.msra.mxu0 0.0
        %1390 = vmatprep.subr.mxu0 0.0
        %1391 = vmatpush1.msra.mxu0 0.0
        %1392 = vmatprep.subr.mxu0 0.0
        %1393 = vmatpush1.msra.mxu0 0.0
        %1394 = vmatprep.subr.mxu0 0.0
        %1395 = vmatpush1.msra.mxu0 0.0
        %1396 = vmatprep.subr.mxu0 0.0
        %1397 = vmatpush1.msra.mxu0 0.0
        %1398 = vmatprep.subr.mxu0 0.0
        %1399 = vmatpush1.msra.mxu0 0.0
        %1400 = vmatprep.subr.mxu0 0.0
        %1401 = vmatpush1.msra.mxu0 0.0
        %1402 = vmatprep.subr.mxu0 0.0
        %1403 = vmatpush1.msra.mxu0 0.0
        %1404 = vmatprep.subr.mxu0 0.0
        %1405 = vmatpush1.msra.mxu0 0.0
        %1406 = vmatprep.subr.mxu0 0.0
        %1407 = vmatpush1.msra.mxu0 0.0
        %1408 = vmatprep.subr.mxu0 0.0
        %1409 = vmatpush1.msra.mxu0 0.0
        %1410 = vmatprep.subr.mxu0 0.0
        %1411 = vmatpush1.msra.mxu0 0.0
        %1412 = vmatprep.subr.mxu0 0.0
        %1413 = vmatpush1.msra.mxu0 0.0
        %1414 = vmatprep.subr.mxu0 0.0
        %1415 = vmatpush1.msra.mxu0 0.0
        %1416 = vmatprep.subr.mxu0 0.0
        %1417 = vmatpush1.msra.mxu0 0.0
        %1418 = vmatprep.subr.mxu0 0.0
        %1419 = vmatpush1.msra.mxu0 0.0
        %1420 = vmatprep.subr.mxu0 0.0
        %1421 = vmatpush1.msra.mxu0 0.0
        %1422 = vmatprep.mubr.f32.mxu0 0.0
        %1423 = vmatmul.mubr.f32.gmra.mrb[0].mxu0 %v1356
        %v1424 = vpop.f32.mrb[0].mxu0
        %v1425 = vadd.f32 0.0, %v1424
        %v1426 = vpop.f32.mrb[0].mxu0
        %1427 = vdwg.mxu0
        %1429 = vrot.lane.b32.xlu0 %v1279, 8
        %v1430 = vpop.permute.xlu0 %1429
        %1433 = vrot.lane.b32.xlu0 %v1352, 16
        %v1434 = vpop.permute.xlu0 %1433
        %1437 = vrot.lane.b32.xlu0 %v1425, 24
        %v1438 = vpop.permute.xlu0 %1437
        %v1440 = vsel %vm779, %v1206, %v1430
        %vm1441 = vcmask 130048
        %v1442 = vsel %vm1441, %v1440, %v1434
        %vm1443 = vcmask 195584
        %v1444 = vsel %vm1443, %v1442, %v1438
        %v1445 = vld [vmem:[#allocation11] sm:$0xff]
        %v1446 = vld [vmem:[#allocation11 + $0x8] sm:$0xff]
        %v1447 = vld [vmem:[#allocation11 + $0x10] sm:$0xff]
        %v1448 = vld [vmem:[#allocation11 + $0x18] sm:$0xff]
        %v1450 = vsel %vm503, %v1444, 0
        %1452 = vmatprep.subr.mxu0 0.0
        %1453 = vmatpush1.msra.mxu0 %v1445
        %1454 = vmatprep.subr.mxu0 0.0
        %1455 = vmatpush1.msra.mxu0 %v1446
        %1456 = vmatprep.subr.mxu0 0.0
        %1457 = vmatpush1.msra.mxu0 %v1447
        %1458 = vmatprep.subr.mxu0 0.0
        %1459 = vmatpush1.msra.mxu0 %v1448
        %1460 = vmatprep.subr.mxu0 0.0
        %1461 = vmatpush1.msra.mxu0 0.0
        %1462 = vmatprep.subr.mxu0 0.0
        %1463 = vmatpush1.msra.mxu0 0.0
        %1464 = vmatprep.subr.mxu0 0.0
        %1465 = vmatpush1.msra.mxu0 0.0
        %1466 = vmatprep.subr.mxu0 0.0
        %1467 = vmatpush1.msra.mxu0 0.0
        %1468 = vmatprep.subr.mxu0 0.0
        %1469 = vmatpush1.msra.mxu0 0.0
        %1470 = vmatprep.subr.mxu0 0.0
        %1471 = vmatpush1.msra.mxu0 0.0
        %1472 = vmatprep.subr.mxu0 0.0
        %1473 = vmatpush1.msra.mxu0 0.0
        %1474 = vmatprep.subr.mxu0 0.0
        %1475 = vmatpush1.msra.mxu0 0.0
        %1476 = vmatprep.subr.mxu0 0.0
        %1477 = vmatpush1.msra.mxu0 0.0
        %1478 = vmatprep.subr.mxu0 0.0
        %1479 = vmatpush1.msra.mxu0 0.0
        %1480 = vmatprep.subr.mxu0 0.0
        %1481 = vmatpush1.msra.mxu0 0.0
        %1482 = vmatprep.subr.mxu0 0.0
        %1483 = vmatpush1.msra.mxu0 0.0
        %1484 = vmatprep.subr.mxu0 0.0
        %1485 = vmatpush1.msra.mxu0 0.0
        %1486 = vmatprep.subr.mxu0 0.0
        %1487 = vmatpush1.msra.mxu0 0.0
        %1488 = vmatprep.subr.mxu0 0.0
        %1489 = vmatpush1.msra.mxu0 0.0
        %1490 = vmatprep.subr.mxu0 0.0
        %1491 = vmatpush1.msra.mxu0 0.0
        %1492 = vmatprep.subr.mxu0 0.0
        %1493 = vmatpush1.msra.mxu0 0.0
        %1494 = vmatprep.subr.mxu0 0.0
        %1495 = vmatpush1.msra.mxu0 0.0
        %1496 = vmatprep.subr.mxu0 0.0
        %1497 = vmatpush1.msra.mxu0 0.0
        %1498 = vmatprep.subr.mxu0 0.0
        %1499 = vmatpush1.msra.mxu0 0.0
        %1500 = vmatprep.subr.mxu0 0.0
        %1501 = vmatpush1.msra.mxu0 0.0
        %1502 = vmatprep.subr.mxu0 0.0
        %1503 = vmatpush1.msra.mxu0 0.0
        %1504 = vmatprep.subr.mxu0 0.0
        %1505 = vmatpush1.msra.mxu0 0.0
        %1506 = vmatprep.subr.mxu0 0.0
        %1507 = vmatpush1.msra.mxu0 0.0
        %1508 = vmatprep.subr.mxu0 0.0
        %1509 = vmatpush1.msra.mxu0 0.0
        %1510 = vmatprep.subr.mxu0 0.0
        %1511 = vmatpush1.msra.mxu0 0.0
        %1512 = vmatprep.subr.mxu0 0.0
        %1513 = vmatpush1.msra.mxu0 0.0
        %1514 = vmatprep.subr.mxu0 0.0
        %1515 = vmatpush1.msra.mxu0 0.0
        %1516 = vmatprep.mubr.f32.mxu0 0.0
        %1517 = vmatmul.mubr.f32.gmra.mrb[0].mxu0 %v1450
        %v1518 = vpop.f32.mrb[0].mxu0
        %v1519 = vadd.f32 %v496, %v1518
        %v1520 = vpop.f32.mrb[0].mxu0
        %1521 = vdwg.mxu0
        %v1522 = vsel %vm503, %v1519, 0.0
        %1523 = vadd.xlane.f32.xlu0 %v1522
        %v1524 = vpop.xlane.xlu0 %1523
        %v1525 = vrcp.pop 32.0
        %v1526 = vmul.f32 %v1524, %v1525
        %v1527 = vsub.f32 %v1519, %v1526
        %v1528 = vmul.f32 %v1527, %v1527
        %v1529 = vsel %vm503, %v1528, 0.0
        %1530 = vadd.xlane.f32.xlu0 %v1529
        %v1531 = vpop.xlane.xlu0 %1530
        %v1532 = vmul.f32 %v1531, %v1525
        %v1533 = vadd.f32 %v1532, 1e-05
        %v1534 = vrsqrt.pop %v1533
        %v1535 = vmul.f32 %v1527, %v1534
        %v1536 = vld [vmem:[%s6] sm:$0x1]
        %v1538 = vlaneseq
        %v1539 = vshrl.u32 %v1538, 7
        %v1540 = vsub.s32 0, %v1539
        %v1541 = vrot.slane %v1536, %v1540
        %v1543 = vmul.f32 %v1535, %v1541
        %v1544 = vld [vmem:[%s7] sm:$0x1]
        %v1546 = vlaneseq
        %v1547 = vshrl.u32 %v1546, 7
        %v1548 = vsub.s32 0, %v1547
        %v1549 = vrot.slane %v1544, %v1548
        %v1551 = vadd.f32 %v1543, %v1549
        %1552 = vst.msk [vmem:[%s488] sm:$0xff] %vm503, %v1551
        %s1553 = sand.u32 %s233, 1
        %s1554 = scalar_lea.sflag [#allocation4], %s1553
        %s1555 = sand.u32 %s233, 1
        %s1556 = smul.addr %s1555, 8
        %s1557 = scalar_lea.vmem [#allocation13], %s1556
        %s1558 = sand.u32 %s259, 1
        %s1559 = scalar_lea.sflag [#allocation15], %s1558
        %s1560 = sand.u32 %s259, 1
        %s1561 = smul.addr %s1560, 32
        %s1562 = scalar_lea.vmem [#allocation14], %s1561
        // Predicated region
        $region77: #{tpu_custom_call.1} parent=51 // pred_check
          %p1563 = pneg %p243
        $region78: #{tpu_custom_call.1} parent=51 // pred_check_branch
          %1565 = sbr.rel (%p1563) target = $region80
        $region79: #{tpu_custom_call.1} parent=51 // pred_region
          %s1567 = ssub.s32 128, 128
          %1568 = vsyncadd %s1554, %s1567
          %s1569 = smul.addr %s37, 128
          %s1570 = scalar_lea.hbm %s8, %s1569
          %s1572 = sshll.u32 %s1557, 4
          %s1573 = int_to_ptr.vmem [resolvable:$true] %s1572
          %1575 = dma.vmem_to_hbm [thread:$0]  %s1573, 128, %s1570, %s1554
        $region80: #{tpu_custom_call.1} parent=51 // pred_fallthru
          _
        // Predicated region
        $region81: #{tpu_custom_call.1} parent=51 // pred_check
          %p1576 = pneg %p269
        $region82: #{tpu_custom_call.1} parent=51 // pred_check_branch
          %1578 = sbr.rel (%p1576) target = $region84
        $region83: #{tpu_custom_call.1} parent=51 // pred_region
          %s1580 = ssub.s32 512, 512
          %1581 = vsyncadd %s1559, %s1580
          %s1582 = smul.addr %s37, 4
          %s1583 = smul.addr %s1582, 128
          %s1584 = scalar_lea.hbm %s9, %s1583
          %s1585 = sshll.u32 %s1562, 4
          %s1586 = int_to_ptr.vmem [resolvable:$true] %s1585
          %1591 = dma.vmem_to_hbm [thread:$0]  %s1586, 512, %s1584, %s1559, 128, 128, 8
        $region84: #{tpu_custom_call.1} parent=51 // pred_fallthru
          _
      $region52: #{tpu_custom_call.1} parent=5 // pred_fallthru
        _
      %p1592 = scmp.le.s32.totalorder 2, %s32
      // Predicated region
      $region85: #{tpu_custom_call.1} parent=5 // pred_check
        %p1593 = pneg %p1592
      $region86: #{tpu_custom_call.1} parent=5 // pred_check_branch
        %1595 = sbr.rel (%p1593) target = $region88
      $region87: #{tpu_custom_call.1} parent=5 // pred_region
        %s1596 = ssub.s32 %s32, 2
        // Predicated region
        $region89: #{tpu_custom_call.1} parent=87 // pred_check
          %p1597 = pneg %p249
        $region90: #{tpu_custom_call.1} parent=87 // pred_check_branch
          %1599 = sbr.rel (%p1597) target = $region92
        $region91: #{tpu_custom_call.1} parent=87 // pred_region
          %s1600 = sand.u32 %s234, 1
          %s1601 = scalar_lea.sflag [#allocation4], %s1600
          %s1602 = sand.u32 %s234, 1
          %s1603 = smul.addr %s1602, 8
          %s1604 = scalar_lea.vmem [#allocation13], %s1603
          %1605 = dma.done %s1601, 128
        $region92: #{tpu_custom_call.1} parent=87 // pred_fallthru
          _
        // Predicated region
        $region93: #{tpu_custom_call.1} parent=87 // pred_check
          %p1606 = pneg %p275
        $region94: #{tpu_custom_call.1} parent=87 // pred_check_branch
          %1608 = sbr.rel (%p1606) target = $region96
        $region95: #{tpu_custom_call.1} parent=87 // pred_region
          %s1609 = sand.u32 %s260, 1
          %s1610 = scalar_lea.sflag [#allocation15], %s1609
          %s1611 = sand.u32 %s260, 1
          %s1612 = smul.addr %s1611, 32
          %s1613 = scalar_lea.vmem [#allocation14], %s1612
          %1614 = dma.done %s1610, 512
        $region96: #{tpu_custom_call.1} parent=87 // pred_fallthru
          _
      $region88: #{tpu_custom_call.1} parent=5 // pred_fallthru
        _
    $region6: #{tpu_custom_call.1} parent=1 // loop_footer
      %s36 = sadd.s32 1, %s32
    $region7: #{tpu_custom_call.1} parent=1 // loop_footer_branch
      %31 = sbr.rel target = $region3
    $region8: #{tpu_custom_call.1} parent=1 // loop_exit
      _
    %1615 = vsyncpa [#allocation3], 1
    %s1616 = scalar_lea.sflag [#allocation3], 1
    %1617 = vsyncpa %s1616, 1
    %1618 = vsyncpa [#allocation6], 1
    %s1619 = scalar_lea.sflag [#allocation6], 1
    %1620 = vsyncpa %s1619, 1
    %1621 = vsyncpa [#allocation9], 1
    %s1622 = scalar_lea.sflag [#allocation9], 1
    %1623 = vsyncpa %s1622, 1
    %1624 = vsyncpa [#allocation12], 1
    %1625 = vsyncpa [#allocation4], 1
    %s1626 = scalar_lea.sflag [#allocation4], 1
    %1627 = vsyncpa %s1626, 1
    %1628 = vsyncpa [#allocation15], 1
    %s1629 = scalar_lea.sflag [#allocation15], 1
    %1630 = vsyncpa %s1629, 1

</llo_original>
